<compile_context>
chip_gen: v7x
topology: tpu7x:2x2x1
jax: 0.10.0
libtpu: 0.0.40
codegen_flags: <defaults>
</compile_context>

<pallas_src>
import functools

import jax
import jax.numpy as jnp
from jax.experimental import pallas as pl
from jax.experimental.pallas import tpu as pltpu


def _tpu_generation_info():
    """(physical per-core VMEM bytes, dual-TC chip?) with conservative fallbacks."""
    kind = ""
    try:
        kind = jax.devices()[0].device_kind.lower()
    except Exception:
        pass
    vmem = None
    try:
        info = pltpu.get_tpu_info()
        for name in ("vmem_capacity_bytes", "vmem_bytes", "vmem_size_bytes"):
            v = getattr(info, name, None)
            if v:
                vmem = int(v)
                break
    except Exception:
        pass
    if vmem is None:
        vmem = (128 << 20) if any(t in kind for t in ("v4", "v5", "v6")) else (64 << 20)
    if "v7" in kind:
        vmem = min(vmem, 64 << 20)   # 64 MiB per TensorCore on v7x
    dual_tc = ("v7" in kind) or vmem <= (96 << 20)
    return vmem, dual_tc


def _pixel_unshuffle_kernel(x_ref, s_ref, o_ref, *, k, h, w, gb,
                            merged_store, precision, acc_dtype):
    # x_ref: (gb*H, W)        gb input planes, rows flattened as (plane, row)
    # s_ref: (k, W, w)        one-hot selectors  s_ref[x, j*k + x, j] = 1
    # o_ref: (gb, k*k, h, w)  gb output plane-groups, dim1 ordered (y, x)
    for y in range(k):
        # Row (sublane) de-interleave: every k-th row starting at y, across all
        # gb planes, in one strided vector load -> (gb*h, W).
        rows = x_ref[pl.ds(y, gb * h, stride=k), :]
        for xx in range(k):
            # Column (lane) de-interleave: one-hot sub-matmul selects columns
            # xx, xx+k, ... -> (gb*h, w).  Exact for f32 (HIGHEST) and for
            # bf16/f16 (values copied through the f32 accumulator).
            # TODO(synk): for MXU-bound f32 at large W, a BF16_BF16_F32_X3 dot
            # algorithm or an XLU lane de-interleave is cheaper and still exact.
            res = jnp.dot(rows, s_ref[xx],
                          preferred_element_type=acc_dtype,
                          precision=precision)
            if res.dtype != o_ref.dtype:
                res = res.astype(o_ref.dtype)
            q = y * k + xx
            if merged_store:
                # h % 8 == 0: free retiling reshape, one full-block store.
                o_ref[:, q, :, :] = res.reshape(gb, h, w)
            else:
                # Sublane-only slices of res (never lane-crossing).
                for cc in range(gb):
                    o_ref[cc, q, :, :] = res[cc * h:(cc + 1) * h, :]


def pixel_unshuffle(x, downscale_factor):
    k = int(downscale_factor)
    B, C, H, W = x.shape
    assert H % k == 0 and W % k == 0, "spatial dims must be divisible by k"
    h, w = H // k, W // k

    if k == 1:
        return x  # identity

    BC = B * C
    esize = jnp.dtype(x.dtype).itemsize
    s_bytes = k * W * w * esize            # == W*W*esize
    merged_store = (h % 8) == 0

    phys_vmem, dual_tc = _tpu_generation_info()
    cap = int(phys_vmem * 0.85)

    def vmem_need(g):
        blk = g * H * W * esize            # one input block == one output block
        inter = g * h * W * esize + 2 * g * h * w * 4   # rows + f32 result
        return 4 * blk + 2 * s_bytes + inter            # in+out double-buffered

    # --- choose how many (H, W) planes to process per grid step -------------
    divisors = [d for d in range(BC, 0, -1) if BC % d == 0]
    # (gb*H) must be sublane aligned unless it spans the whole flattened axis.
    aligned = [g for g in divisors if (g * H) % 8 == 0 or g == BC] or [BC]

    def ok(g, two_steps):
        if vmem_need(g) > cap:
            return False
        if not merged_store and g * k * k > 64:   # bound store unrolling
            return False
        if two_steps and BC >= 2 and g > BC // 2:
            return False
        return True

    gb = next((g for g in aligned if ok(g, dual_tc)), None)
    if gb is None:
        gb = next((g for g in aligned if ok(g, False)), None)
    if gb is None:
        # Best effort: smallest aligned block; may exceed the VMEM budget.
        # TODO(synk): tile H and W (with a per-tile permutation operand) when a
        # single (H, W) plane does not fit VMEM.
        gb = aligned[-1]

    grid = (BC // gb,)

    # One-hot column selectors in the data's native dtype:
    #   S[x, j*k + x, j] = 1   so that  rows @ S[x]  extracts columns x, x+k, ...
    lane = jnp.arange(W)[None, :, None]
    col = jnp.arange(w)[None, None, :]
    xs = jnp.arange(k)[:, None, None]
    S = (lane == col * k + xs).astype(x.dtype)          # (k, W, w)

    # dtype-conditional precision (HIGHEST only where f32 exactness needs it).
    precision = (jax.lax.Precision.HIGHEST if x.dtype == jnp.float32
                 else jax.lax.Precision.DEFAULT)
    acc_dtype = jnp.float32

    nb = vmem_need(gb)
    vmem_limit = min(max(nb + (8 << 20), 32 << 20), phys_vmem - (8 << 20))
    vmem_limit = int(max(vmem_limit, 16 << 20))

    kernel = functools.partial(
        _pixel_unshuffle_kernel, k=k, h=h, w=w, gb=gb,
        merged_store=merged_store, precision=precision, acc_dtype=acc_dtype)

    out = pl.pallas_call(
        kernel,
        out_shape=jax.ShapeDtypeStruct((BC, k * k, h, w), x.dtype),
        grid_spec=pltpu.PrefetchScalarGridSpec(
            num_scalar_prefetch=0,
            grid=grid,
            in_specs=[
                # gb whole image planes per step: one large contiguous DMA.
                pl.BlockSpec((gb * H, W), lambda g: (g, 0)),
                # Constant block index -> fetched once, then kept resident.
                pl.BlockSpec((k, W, w), lambda g: (0, 0, 0)),
            ],
            out_specs=pl.BlockSpec((gb, k * k, h, w), lambda g: (g, 0, 0, 0)),
        ),
        compiler_params=pltpu.CompilerParams(
            dimension_semantics=("parallel",),
            vmem_limit_bytes=vmem_limit),
    )(x.reshape(BC * H, W), S)

    # (B*C, k*k, h, w) -> (B, C*k*k, h, w): pure metadata reshape (no copy).
    # Note: for w < 128 the kernel is inherently masked-store bound; a lane-dense
    # output layout would require an extra HBM transpose pass, so we accept it.
    return out.reshape(B, C * k * k, h, w)


def _reference(x, k):
    B, C, H, W = x.shape
    h, w = H // k, W // k
    y = x.reshape(B, C, h, k, w, k)
    y = jnp.transpose(y, (0, 1, 3, 5, 2, 4))   # (B, C, ky, kx, h, w)
    return y.reshape(B, C * k * k, h, w)


if __name__ == "__main__":
    key = jax.random.PRNGKey(0)
    B, C, H, W, k = 2, 4, 16, 16, 2

    # f32 path (HIGHEST one-hot matmul -> bit exact).
    x32 = jax.random.normal(key, (B, C, H, W), dtype=jnp.float32)
    out32 = jax.block_until_ready(pixel_unshuffle(x32, k))
    assert out32.shape == (B, k * k * C, H // k, W // k), out32.shape
    assert jnp.array_equal(out32, _reference(x32, k)), "f32 mismatch vs reference"

    # bf16 path (single-pass MXU; values copied exactly through f32 accumulate).
    xbf = x32.astype(jnp.bfloat16)
    outbf = jax.block_until_ready(pixel_unshuffle(xbf, k))
    assert jnp.array_equal(outbf, _reference(xbf, k)), "bf16 mismatch vs reference"

    print("KERNEL_OK")
</pallas_src>

<mosaic_0001>
module attributes {stable_mosaic.version = 11 : i64} {
  func.func @_pixel_unshuffle_kernel(%arg0: i32, %arg1: memref<64x16xf32, #tpu.memory_space<vmem>>, %arg2: memref<2x16x8xf32, #tpu.memory_space<vmem>>, %arg3: memref<4x4x8x8xf32, #tpu.memory_space<vmem>>) attributes {dimension_semantics = [#tpu.dimension_semantics<parallel>], iteration_bounds = array<i64: 2>, scalar_prefetch = 0 : i64, scratch_operands = 0 : i64, tpu.core_type = #tpu.core_type<tc>, window_params = [{transform_indices = @transform_0, window_bounds = array<i64: 64, 16>}, {pipeline_mode = #tpu.pipeline_mode<synchronous>, transform_indices = @transform_1, window_bounds = array<i64: 2, 16, 8>}, {transform_indices = @transform_2, window_bounds = array<i64: 4, 4, 8, 8>}]} {
    %c0 = arith.constant 0 : index
    %c0_0 = arith.constant 0 : index
    %0 = tpu.strided_load %arg1[%c0, %c0_0] {strides = array<i32: 2, 1>} : memref<64x16xf32, #tpu.memory_space<vmem>>, vector<32x16xf32>
    %c0_1 = arith.constant 0 : index
    %c0_2 = arith.constant 0 : index
    %c0_3 = arith.constant 0 : index
    %1 = vector.load %arg2[%c0_1, %c0_2, %c0_3] : memref<2x16x8xf32, #tpu.memory_space<vmem>>, vector<1x16x8xf32>
    %2 = vector.shape_cast %1 : vector<1x16x8xf32> to vector<16x8xf32>
    %cst = arith.constant dense<0.000000e+00> : vector<32x8xf32>
    %3 = tpu.matmul %0, %2, %cst {dimension_numbers = #tpu.dot_dimension_numbers<[1], [0], [0], [1], [0, 0, 1, 1], [], []>, precision = #tpu.contract_precision<fp32>} : vector<32x16xf32>, vector<16x8xf32>, vector<32x8xf32> -> vector<32x8xf32>
    %4 = vector.shape_cast %3 : vector<32x8xf32> to vector<4x8x8xf32>
    %c0_4 = arith.constant 0 : index
    %c0_5 = arith.constant 0 : index
    %c0_6 = arith.constant 0 : index
    %c0_7 = arith.constant 0 : index
    %5 = vector.load %arg3[%c0_4, %c0_5, %c0_6, %c0_7] : memref<4x4x8x8xf32, #tpu.memory_space<vmem>>, vector<4x1x8x8xf32>
    %6 = vector.shape_cast %5 : vector<4x1x8x8xf32> to vector<4x8x8xf32>
    %7 = vector.shape_cast %4 : vector<4x8x8xf32> to vector<4x1x8x8xf32>
    tpu.vector_store %arg3[%c0_4, %c0_5, %c0_6, %c0_7], %7 {strides = array<i32>} : memref<4x4x8x8xf32, #tpu.memory_space<vmem>>, vector<4x1x8x8xf32>,
    %c1 = arith.constant 1 : index
    %c0_8 = arith.constant 0 : index
    %c0_9 = arith.constant 0 : index
    %8 = vector.load %arg2[%c1, %c0_8, %c0_9] : memref<2x16x8xf32, #tpu.memory_space<vmem>>, vector<1x16x8xf32>
    %9 = vector.shape_cast %8 : vector<1x16x8xf32> to vector<16x8xf32>
    %cst_10 = arith.constant dense<0.000000e+00> : vector<32x8xf32>
    %10 = tpu.matmul %0, %9, %cst_10 {dimension_numbers = #tpu.dot_dimension_numbers<[1], [0], [0], [1], [0, 0, 1, 1], [], []>, precision = #tpu.contract_precision<fp32>} : vector<32x16xf32>, vector<16x8xf32>, vector<32x8xf32> -> vector<32x8xf32>
    %11 = vector.shape_cast %10 : vector<32x8xf32> to vector<4x8x8xf32>
    %c0_11 = arith.constant 0 : index
    %c1_12 = arith.constant 1 : index
    %c0_13 = arith.constant 0 : index
    %c0_14 = arith.constant 0 : index
    %12 = vector.load %arg3[%c0_11, %c1_12, %c0_13, %c0_14] : memref<4x4x8x8xf32, #tpu.memory_space<vmem>>, vector<4x1x8x8xf32>
    %13 = vector.shape_cast %12 : vector<4x1x8x8xf32> to vector<4x8x8xf32>
    %14 = vector.shape_cast %11 : vector<4x8x8xf32> to vector<4x1x8x8xf32>
    tpu.vector_store %arg3[%c0_11, %c1_12, %c0_13, %c0_14], %14 {strides = array<i32>} : memref<4x4x8x8xf32, #tpu.memory_space<vmem>>, vector<4x1x8x8xf32>,
    %c1_15 = arith.constant 1 : index
    %c0_16 = arith.constant 0 : index
    %15 = tpu.strided_load %arg1[%c1_15, %c0_16] {strides = array<i32: 2, 1>} : memref<64x16xf32, #tpu.memory_space<vmem>>, vector<32x16xf32>
    %c0_17 = arith.constant 0 : index
    %c0_18 = arith.constant 0 : index
    %c0_19 = arith.constant 0 : index
    %16 = vector.load %arg2[%c0_17, %c0_18, %c0_19] : memref<2x16x8xf32, #tpu.memory_space<vmem>>, vector<1x16x8xf32>
    %17 = vector.shape_cast %16 : vector<1x16x8xf32> to vector<16x8xf32>
    %cst_20 = arith.constant dense<0.000000e+00> : vector<32x8xf32>
    %18 = tpu.matmul %15, %17, %cst_20 {dimension_numbers = #tpu.dot_dimension_numbers<[1], [0], [0], [1], [0, 0, 1, 1], [], []>, precision = #tpu.contract_precision<fp32>} : vector<32x16xf32>, vector<16x8xf32>, vector<32x8xf32> -> vector<32x8xf32>
    %19 = vector.shape_cast %18 : vector<32x8xf32> to vector<4x8x8xf32>
    %c0_21 = arith.constant 0 : index
    %c2 = arith.constant 2 : index
    %c0_22 = arith.constant 0 : index
    %c0_23 = arith.constant 0 : index
    %20 = vector.load %arg3[%c0_21, %c2, %c0_22, %c0_23] : memref<4x4x8x8xf32, #tpu.memory_space<vmem>>, vector<4x1x8x8xf32>
    %21 = vector.shape_cast %20 : vector<4x1x8x8xf32> to vector<4x8x8xf32>
    %22 = vector.shape_cast %19 : vector<4x8x8xf32> to vector<4x1x8x8xf32>
    tpu.vector_store %arg3[%c0_21, %c2, %c0_22, %c0_23], %22 {strides = array<i32>} : memref<4x4x8x8xf32, #tpu.memory_space<vmem>>, vector<4x1x8x8xf32>,
    %c1_24 = arith.constant 1 : index
    %c0_25 = arith.constant 0 : index
    %c0_26 = arith.constant 0 : index
    %23 = vector.load %arg2[%c1_24, %c0_25, %c0_26] : memref<2x16x8xf32, #tpu.memory_space<vmem>>, vector<1x16x8xf32>
    %24 = vector.shape_cast %23 : vector<1x16x8xf32> to vector<16x8xf32>
    %cst_27 = arith.constant dense<0.000000e+00> : vector<32x8xf32>
    %25 = tpu.matmul %15, %24, %cst_27 {dimension_numbers = #tpu.dot_dimension_numbers<[1], [0], [0], [1], [0, 0, 1, 1], [], []>, precision = #tpu.contract_precision<fp32>} : vector<32x16xf32>, vector<16x8xf32>, vector<32x8xf32> -> vector<32x8xf32>
    %26 = vector.shape_cast %25 : vector<32x8xf32> to vector<4x8x8xf32>
    %c0_28 = arith.constant 0 : index
    %c3 = arith.constant 3 : index
    %c0_29 = arith.constant 0 : index
    %c0_30 = arith.constant 0 : index
    %27 = vector.load %arg3[%c0_28, %c3, %c0_29, %c0_30] : memref<4x4x8x8xf32, #tpu.memory_space<vmem>>, vector<4x1x8x8xf32>
    %28 = vector.shape_cast %27 : vector<4x1x8x8xf32> to vector<4x8x8xf32>
    %29 = vector.shape_cast %26 : vector<4x8x8xf32> to vector<4x1x8x8xf32>
    tpu.vector_store %arg3[%c0_28, %c3, %c0_29, %c0_30], %29 {strides = array<i32>} : memref<4x4x8x8xf32, #tpu.memory_space<vmem>>, vector<4x1x8x8xf32>,
    return
  }
  func.func @transform_0(%arg0: i32) -> (i32, i32) {
    %c0_i32 = arith.constant 0 : i32
    %c0_i32_0 = arith.constant 0 : i32
    return %arg0, %c0_i32 : i32, i32
  }
  func.func @transform_1(%arg0: i32) -> (i32, i32, i32) {
    %c0_i32 = arith.constant 0 : i32
    %c0_i32_0 = arith.constant 0 : i32
    %c0_i32_1 = arith.constant 0 : i32
    %c0_i32_2 = arith.constant 0 : i32
    return %c0_i32, %c0_i32_0, %c0_i32_1 : i32, i32, i32
  }
  func.func @transform_2(%arg0: i32) -> (i32, i32, i32, i32) {
    %c0_i32 = arith.constant 0 : i32
    %c0_i32_0 = arith.constant 0 : i32
    %c0_i32_1 = arith.constant 0 : i32
    %c0_i32_2 = arith.constant 0 : i32
    return %arg0, %c0_i32, %c0_i32_0, %c0_i32_1 : i32, i32, i32, i32
  }
}

</mosaic_0001>

<llo_original>
// kernel: tpu_custom_call.1
$region0: #{tpu_custom_call.1}
  #allocation0 [shape = 'u32[]', space=smem, size = 0x4, offset = 0x4, fixed_abs, tag = 'smem constant byte address 0x4 - core index']
  #allocation1 [shape = 'u32[144,128]{1,0:T(1,128)}', space=vmem, size = 0x12000, scoped, tag = 'internal scratch']
  %s0 = inlined_call_operand.vmem [shape: f32[128,16], index: 0, kind: input, shape index: {}]
  %s1 = inlined_call_operand.vmem [shape: f32[2,16,8], index: 1, kind: input, shape index: {}]
  %s2 = inlined_call_operand.hbm [shape: f32[8,4,8,8], index: 2, kind: output, shape index: {}]
  %s3 = sld [smem:[#allocation0]]
  $region41: #{tpu_custom_call.1} parent=0
    _
  %s5 = ssub.s32 1, %s3
  %s6 = scalar_select 0, %s5, %s3
  $region1: #{tpu_custom_call.1} parent=0
    #allocation2 [shape = 'u8[131072]{0}', space=vmem, size = 0x20000, scoped, tag = 'output window, operand 0']
    #allocation3 [shape = 's32[2]{0}', space=sflag, size = 0x8, scoped, tag = 'scoped memory for tpu_custom_call.1']
    %7 = vsyncpa [#allocation3], 0
    %s8 = scalar_lea.sflag [#allocation3], 1
    %9 = vsyncpa %s8, 0
    loop: start=0, step=1, limit=4
    $region2: #{tpu_custom_call.1} parent=1 // loop_pre_header
      _
    $region3: #{tpu_custom_call.1} parent=1 // loop_header
      %s11 = sphi 0, %s15
      %p12 = scmp.ge.s32.totalorder %s11, 4
      %s21 = sphi 0, %s23
      %s24 = sphi 0, %s21
      %s25 = sphi 0, %s24
      %s41 = sphi 0, %s25
      %s45 = sphi 0, %s45
      %s47 = sphi 0, %s45
      %s48 = sphi 0, %s47
      %s62 = sphi 0, %s48
      %s68 = sphi 0, %s70
      %s71 = sphi 0, %s68
      %s72 = sphi 0, %s71
      %s88 = sphi 0, %s72
    $region4: #{tpu_custom_call.1} parent=1 // loop_header_branch
      %14 = sbr.rel (%p12) target = $region8
    $region5: #{tpu_custom_call.1} parent=1 // loop_body
      %s16 = ssub.s32 %s11, 1
      %s17 = ssub.s32 %s11, 2
      %s18 = sadd.s32 %s11, 1
      %s19 = ssub.s32 %s11, %s18
      %p20 = scmp.eq.s32.totalorder %s19, 0
      %s22 = sadd.s32 %s21, 1
      %s23 = scalar_select %p20, %s21, %s22
      %p26 = pneg %p20
      %p27 = scmp.eq.s32.totalorder %s11, 1
      %p28 = por %p26, %p27
      %p29 = scmp.ne.s32.totalorder %s21, %s24
      %p30 = scmp.eq.s32.totalorder %s11, 0
      %p31 = por %p29, %p30
      %p32 = scmp.ne.s32.totalorder %s21, %s24
      %p33 = scmp.eq.s32.totalorder %s16, 1
      %p34 = por %p32, %p33
      %p35 = scmp.ne.s32.totalorder %s24, %s25
      %p36 = scmp.eq.s32.totalorder %s16, 0
      %p37 = por %p35, %p36
      %p38 = scmp.ne.s32.totalorder %s24, %s25
      %p39 = scmp.eq.s32.totalorder %s17, 1
      %p40 = por %p38, %p39
      %p42 = scmp.ne.s32.totalorder %s25, %s41
      %p43 = scmp.eq.s32.totalorder %s17, 0
      %p44 = por %p42, %p43
      %s46 = sadd.s32 %s45, 1
      %p49 = scmp.eq.s32.totalorder %s11, 1
      %p50 = scmp.ne.s32.totalorder %s45, %s47
      %p51 = scmp.eq.s32.totalorder %s11, 0
      %p52 = por %p50, %p51
      %p53 = scmp.ne.s32.totalorder %s45, %s47
      %p54 = scmp.eq.s32.totalorder %s16, 1
      %p55 = por %p53, %p54
      %p56 = scmp.ne.s32.totalorder %s47, %s48
      %p57 = scmp.eq.s32.totalorder %s16, 0
      %p58 = por %p56, %p57
      %p59 = scmp.ne.s32.totalorder %s47, %s48
      %p60 = scmp.eq.s32.totalorder %s17, 1
      %p61 = por %p59, %p60
      %p63 = scmp.ne.s32.totalorder %s48, %s62
      %p64 = scmp.eq.s32.totalorder %s17, 0
      %p65 = por %p63, %p64
      %s66 = ssub.s32 %s11, %s18
      %p67 = scmp.eq.s32.totalorder %s66, 0
      %s69 = sadd.s32 %s68, 1
      %s70 = scalar_select %p67, %s68, %s69
      %p73 = pneg %p67
      %p74 = scmp.eq.s32.totalorder %s11, 1
      %p75 = por %p73, %p74
      %p76 = scmp.ne.s32.totalorder %s68, %s71
      %p77 = scmp.eq.s32.totalorder %s11, 0
      %p78 = por %p76, %p77
      %p79 = scmp.ne.s32.totalorder %s68, %s71
      %p80 = scmp.eq.s32.totalorder %s16, 1
      %p81 = por %p79, %p80
      %p82 = scmp.ne.s32.totalorder %s71, %s72
      %p83 = scmp.eq.s32.totalorder %s16, 0
      %p84 = por %p82, %p83
      %p85 = scmp.ne.s32.totalorder %s71, %s72
      %p86 = scmp.eq.s32.totalorder %s17, 1
      %p87 = por %p85, %p86
      %p89 = scmp.ne.s32.totalorder %s72, %s88
      %p90 = scmp.eq.s32.totalorder %s17, 0
      %p91 = por %p89, %p90
      %p92 = scmp.le.s32.totalorder 1, %s11
      %p93 = scmp.lt.s32.totalorder %s11, 3
      %p94 = pnand %p92, %p93
      %p95 = pneg %p94
      // Predicated region
      $region9: #{tpu_custom_call.1} parent=5 // pred_check
        _
      $region10: #{tpu_custom_call.1} parent=5 // pred_check_branch
        %97 = sbr.rel (%p94) target = $region12
      $region11: #{tpu_custom_call.1} parent=5 // pred_region
        %s98 = ssub.s32 %s11, 1
        // Predicated region
        $region13: #{tpu_custom_call.1} parent=11 // pred_check
          %p99 = pneg %p58
        $region14: #{tpu_custom_call.1} parent=11 // pred_check_branch
          %101 = sbr.rel (%p99) target = $region16
        $region15: #{tpu_custom_call.1} parent=11 // pred_region
          _
        $region16: #{tpu_custom_call.1} parent=11 // pred_fallthru
          _
      $region12: #{tpu_custom_call.1} parent=5 // pred_fallthru
        _
      %p102 = scmp.lt.s32.totalorder %s11, 2
      // Predicated region
      $region17: #{tpu_custom_call.1} parent=5 // pred_check
        %p103 = pneg %p102
      $region18: #{tpu_custom_call.1} parent=5 // pred_check_branch
        %105 = sbr.rel (%p103) target = $region20
      $region19: #{tpu_custom_call.1} parent=5 // pred_region
        // Predicated region
        $region21: #{tpu_custom_call.1} parent=19 // pred_check
          %p106 = pneg %p31
        $region22: #{tpu_custom_call.1} parent=19 // pred_check_branch
          %108 = sbr.rel (%p106) target = $region24
        $region23: #{tpu_custom_call.1} parent=19 // pred_region
          %s109 = smul.u32 8, %s11
          %p110 = scmp.lt.s32.totalorder %s109, 15
          %s111 = scalar_select %p110, %s109, 15
          %s112 = smul.addr %s111, 8
          %s113 = scalar_lea.vmem %s0, %s112
          %s114 = smul.u32 8, %s11
        $region24: #{tpu_custom_call.1} parent=19 // pred_fallthru
          _
      $region20: #{tpu_custom_call.1} parent=5 // pred_fallthru
        _
      %p115 = scmp.le.s32.totalorder 1, %s11
      %p116 = scmp.lt.s32.totalorder %s11, 3
      %p117 = pnand %p115, %p116
      %p118 = pneg %p117
      // Predicated region
      $region25: #{tpu_custom_call.1} parent=5 // pred_check
        _
      $region26: #{tpu_custom_call.1} parent=5 // pred_check_branch
        %120 = sbr.rel (%p117) target = $region28
      $region27: #{tpu_custom_call.1} parent=5 // pred_region
        %s121 = ssub.s32 %s11, 1
        %s122 = smul.u32 8, %s16
        %p123 = scmp.lt.s32.totalorder %s122, 15
        %s124 = scalar_select %p123, %s122, 15
        %s125 = smul.addr %s124, 8
        %s126 = scalar_lea.vmem %s0, %s125
        %p127 = pneg %p37
        %p128 = pneg %p34
        %p129 = pneg %p58
        %p130 = pneg %p55
        %p131 = pneg %p84
        %p132 = pneg %p81
        %s133 = sand.u32 %s71, 1
        %s134 = scalar_lea.sflag [#allocation3], %s133
        %s135 = sand.u32 %s71, 1
        %s136 = smul.addr %s135, 128
        %s137 = scalar_lea.vmem [#allocation2], %s136
        %s138 = smul.u32 8, %s16
        %p139 = scmp.lt.s32.totalorder %s138, 15
        %s140 = scalar_select %p139, %s138, 15
        %s141 = smul.addr %s140, 8
        %s142 = scalar_lea.vmem %s0, %s141
        %s143 = smul.u32 8, %s16
        %s144 = smul.u32 4, %s16
        %v145 = vld [vmem:[%s142] ss:$2 sm:$0xff]
        %s146 = scalar_lea.vmem %s142, 16
        %v147 = vld [vmem:[%s146] ss:$2 sm:$0xff]
        %s148 = scalar_lea.vmem %s142, 32
        %v149 = vld [vmem:[%s148] ss:$2 sm:$0xff]
        %s150 = scalar_lea.vmem %s142, 48
        %v151 = vld [vmem:[%s150] ss:$2 sm:$0xff]
        %v152 = vld [vmem:[%s1] sm:$0xff]
        %v153 = vld [vmem:[%s1 + $0x8] sm:$0xff]
        %vm154 = vcmask 130048
        %v156 = vsel %vm154, %v145, 0
        %v159 = vsel %vm154, %v147, 0
        %v162 = vsel %vm154, %v149, 0
        %v165 = vsel %vm154, %v151, 0
        %167 = vmatprep.subr.mxu0 0.0
        %v168 = vand.u32 %v152, 4294901760
        %169 = vmatpush1.msra.mxu0 %v168
        %170 = vmatprep.subr.mxu0 0.0
        %v171 = vand.u32 %v153, 4294901760
        %172 = vmatpush1.msra.mxu0 %v171
        %173 = vmatprep.subr.mxu0 0.0
        %174 = vmatpush1.msra.mxu0 0.0
        %175 = vmatprep.subr.mxu0 0.0
        %176 = vmatpush1.msra.mxu0 0.0
        %177 = vmatprep.subr.mxu0 0.0
        %178 = vmatpush1.msra.mxu0 0.0
        %179 = vmatprep.subr.mxu0 0.0
        %180 = vmatpush1.msra.mxu0 0.0
        %181 = vmatprep.subr.mxu0 0.0
        %182 = vmatpush1.msra.mxu0 0.0
        %183 = vmatprep.subr.mxu0 0.0
        %184 = vmatpush1.msra.mxu0 0.0
        %185 = vmatprep.subr.mxu0 0.0
        %186 = vmatpush1.msra.mxu0 0.0
        %187 = vmatprep.subr.mxu0 0.0
        %188 = vmatpush1.msra.mxu0 0.0
        %189 = vmatprep.subr.mxu0 0.0
        %190 = vmatpush1.msra.mxu0 0.0
        %191 = vmatprep.subr.mxu0 0.0
        %192 = vmatpush1.msra.mxu0 0.0
        %193 = vmatprep.subr.mxu0 0.0
        %194 = vmatpush1.msra.mxu0 0.0
        %195 = vmatprep.subr.mxu0 0.0
        %196 = vmatpush1.msra.mxu0 0.0
        %197 = vmatprep.subr.mxu0 0.0
        %198 = vmatpush1.msra.mxu0 0.0
        %199 = vmatprep.subr.mxu0 0.0
        %200 = vmatpush1.msra.mxu0 0.0
        %201 = vmatprep.subr.mxu0 0.0
        %202 = vmatpush1.msra.mxu0 0.0
        %203 = vmatprep.subr.mxu0 0.0
        %204 = vmatpush1.msra.mxu0 0.0
        %205 = vmatprep.subr.mxu0 0.0
        %206 = vmatpush1.msra.mxu0 0.0
        %207 = vmatprep.subr.mxu0 0.0
        %208 = vmatpush1.msra.mxu0 0.0
        %209 = vmatprep.subr.mxu0 0.0
        %210 = vmatpush1.msra.mxu0 0.0
        %211 = vmatprep.subr.mxu0 0.0
        %212 = vmatpush1.msra.mxu0 0.0
        %213 = vmatprep.subr.mxu0 0.0
        %214 = vmatpush1.msra.mxu0 0.0
        %215 = vmatprep.subr.mxu0 0.0
        %216 = vmatpush1.msra.mxu0 0.0
        %217 = vmatprep.subr.mxu0 0.0
        %218 = vmatpush1.msra.mxu0 0.0
        %219 = vmatprep.subr.mxu0 0.0
        %220 = vmatpush1.msra.mxu0 0.0
        %221 = vmatprep.subr.mxu0 0.0
        %222 = vmatpush1.msra.mxu0 0.0
        %223 = vmatprep.subr.mxu0 0.0
        %224 = vmatpush1.msra.mxu0 0.0
        %225 = vmatprep.subr.mxu0 0.0
        %226 = vmatpush1.msra.mxu0 0.0
        %227 = vmatprep.subr.mxu0 0.0
        %228 = vmatpush1.msra.mxu0 0.0
        %229 = vmatprep.subr.mxu0 0.0
        %230 = vmatpush1.msra.mxu0 0.0
        %231 = vmatprep.subr.mxu0 0.0
        %232 = vmatpush1.msra.mxu0 0.0
        %233 = vmatprep.mubr.f32.mxu0 0.0
        %v234 = vand.u32 %v156, 4294901760
        %v235 = vsub.f32 %v156, %v234
        %v236 = vand.u32 %v235, 4294901760
        %v237 = vsub.f32 %v235, %v236
        %v238 = vand.u32 %v237, 4294901760
        %239 = vmatmul.mubr.f32.gmra.mrb[0].mxu0 %v238
        %v240 = vpop.f32.mrb[0].mxu0
        %v241 = vadd.f32 0.0, %v240
        %v242 = vpop.f32.mrb[0].mxu0
        %243 = vmatprep.mubr.f32.mxu0 0.0
        %v244 = vand.u32 %v159, 4294901760
        %v245 = vsub.f32 %v159, %v244
        %v246 = vand.u32 %v245, 4294901760
        %v247 = vsub.f32 %v245, %v246
        %v248 = vand.u32 %v247, 4294901760
        %249 = vmatmul.mubr.f32.gmra.mrb[0].mxu0 %v248
        %v250 = vpop.f32.mrb[0].mxu0
        %v251 = vadd.f32 0.0, %v250
        %v252 = vpop.f32.mrb[0].mxu0
        %253 = vmatprep.mubr.f32.mxu0 0.0
        %v254 = vand.u32 %v162, 4294901760
        %v255 = vsub.f32 %v162, %v254
        %v256 = vand.u32 %v255, 4294901760
        %v257 = vsub.f32 %v255, %v256
        %v258 = vand.u32 %v257, 4294901760
        %259 = vmatmul.mubr.f32.gmra.mrb[0].mxu0 %v258
        %v260 = vpop.f32.mrb[0].mxu0
        %v261 = vadd.f32 0.0, %v260
        %v262 = vpop.f32.mrb[0].mxu0
        %263 = vmatprep.mubr.f32.mxu0 0.0
        %v264 = vand.u32 %v165, 4294901760
        %v265 = vsub.f32 %v165, %v264
        %v266 = vand.u32 %v265, 4294901760
        %v267 = vsub.f32 %v265, %v266
        %v268 = vand.u32 %v267, 4294901760
        %269 = vmatmul.mubr.f32.gmra.mrb[0].mxu0 %v268
        %v270 = vpop.f32.mrb[0].mxu0
        %v271 = vadd.f32 0.0, %v270
        %v272 = vpop.f32.mrb[0].mxu0
        %273 = vdwg.mxu0
        %274 = vmatprep.subr.mxu0 0.0
        %v275 = vand.u32 %v152, 4294901760
        %v276 = vsub.f32 %v152, %v275
        %v277 = vand.u32 %v276, 4294901760
        %v278 = vsub.f32 %v276, %v277
        %v279 = vand.u32 %v278, 4294901760
        %280 = vmatpush1.msra.mxu0 %v279
        %281 = vmatprep.subr.mxu0 0.0
        %v282 = vand.u32 %v153, 4294901760
        %v283 = vsub.f32 %v153, %v282
        %v284 = vand.u32 %v283, 4294901760
        %v285 = vsub.f32 %v283, %v284
        %v286 = vand.u32 %v285, 4294901760
        %287 = vmatpush1.msra.mxu0 %v286
        %288 = vmatprep.subr.mxu0 0.0
        %289 = vmatpush1.msra.mxu0 0.0
        %290 = vmatprep.subr.mxu0 0.0
        %291 = vmatpush1.msra.mxu0 0.0
        %292 = vmatprep.subr.mxu0 0.0
        %293 = vmatpush1.msra.mxu0 0.0
        %294 = vmatprep.subr.mxu0 0.0
        %295 = vmatpush1.msra.mxu0 0.0
        %296 = vmatprep.subr.mxu0 0.0
        %297 = vmatpush1.msra.mxu0 0.0
        %298 = vmatprep.subr.mxu0 0.0
        %299 = vmatpush1.msra.mxu0 0.0
        %300 = vmatprep.subr.mxu0 0.0
        %301 = vmatpush1.msra.mxu0 0.0
        %302 = vmatprep.subr.mxu0 0.0
        %303 = vmatpush1.msra.mxu0 0.0
        %304 = vmatprep.subr.mxu0 0.0
        %305 = vmatpush1.msra.mxu0 0.0
        %306 = vmatprep.subr.mxu0 0.0
        %307 = vmatpush1.msra.mxu0 0.0
        %308 = vmatprep.subr.mxu0 0.0
        %309 = vmatpush1.msra.mxu0 0.0
        %310 = vmatprep.subr.mxu0 0.0
        %311 = vmatpush1.msra.mxu0 0.0
        %312 = vmatprep.subr.mxu0 0.0
        %313 = vmatpush1.msra.mxu0 0.0
        %314 = vmatprep.subr.mxu0 0.0
        %315 = vmatpush1.msra.mxu0 0.0
        %316 = vmatprep.subr.mxu0 0.0
        %317 = vmatpush1.msra.mxu0 0.0
        %318 = vmatprep.subr.mxu0 0.0
        %319 = vmatpush1.msra.mxu0 0.0
        %320 = vmatprep.subr.mxu0 0.0
        %321 = vmatpush1.msra.mxu0 0.0
        %322 = vmatprep.subr.mxu0 0.0
        %323 = vmatpush1.msra.mxu0 0.0
        %324 = vmatprep.subr.mxu0 0.0
        %325 = vmatpush1.msra.mxu0 0.0
        %326 = vmatprep.subr.mxu0 0.0
        %327 = vmatpush1.msra.mxu0 0.0
        %328 = vmatprep.subr.mxu0 0.0
        %329 = vmatpush1.msra.mxu0 0.0
        %330 = vmatprep.subr.mxu0 0.0
        %331 = vmatpush1.msra.mxu0 0.0
        %332 = vmatprep.subr.mxu0 0.0
        %333 = vmatpush1.msra.mxu0 0.0
        %334 = vmatprep.subr.mxu0 0.0
        %335 = vmatpush1.msra.mxu0 0.0
        %336 = vmatprep.subr.mxu0 0.0
        %337 = vmatpush1.msra.mxu0 0.0
        %338 = vmatprep.subr.mxu0 0.0
        %339 = vmatpush1.msra.mxu0 0.0
        %340 = vmatprep.subr.mxu0 0.0
        %341 = vmatpush1.msra.mxu0 0.0
        %342 = vmatprep.subr.mxu0 0.0
        %343 = vmatpush1.msra.mxu0 0.0
        %344 = vmatprep.subr.mxu0 0.0
        %345 = vmatpush1.msra.mxu0 0.0
        %346 = vmatprep.subr.mxu0 0.0
        %347 = vmatpush1.msra.mxu0 0.0
        %348 = vmatprep.mubr.f32.mxu0 0.0
        %v349 = vand.u32 %v156, 4294901760
        %350 = vmatmul.mubr.f32.gmra.mrb[0].mxu0 %v349
        %v351 = vpop.f32.mrb[0].mxu0
        %v352 = vadd.f32 %v241, %v351
        %v353 = vpop.f32.mrb[0].mxu0
        %354 = vmatprep.mubr.f32.mxu0 0.0
        %v355 = vand.u32 %v159, 4294901760
        %356 = vmatmul.mubr.f32.gmra.mrb[0].mxu0 %v355
        %v357 = vpop.f32.mrb[0].mxu0
        %v358 = vadd.f32 %v251, %v357
        %v359 = vpop.f32.mrb[0].mxu0
        %360 = vmatprep.mubr.f32.mxu0 0.0
        %v361 = vand.u32 %v162, 4294901760
        %362 = vmatmul.mubr.f32.gmra.mrb[0].mxu0 %v361
        %v363 = vpop.f32.mrb[0].mxu0
        %v364 = vadd.f32 %v261, %v363
        %v365 = vpop.f32.mrb[0].mxu0
        %366 = vmatprep.mubr.f32.mxu0 0.0
        %v367 = vand.u32 %v165, 4294901760
        %368 = vmatmul.mubr.f32.gmra.mrb[0].mxu0 %v367
        %v369 = vpop.f32.mrb[0].mxu0
        %v370 = vadd.f32 %v271, %v369
        %v371 = vpop.f32.mrb[0].mxu0
        %372 = vdwg.mxu0
        %373 = vmatprep.subr.mxu0 0.0
        %v374 = vand.u32 %v152, 4294901760
        %v375 = vsub.f32 %v152, %v374
        %376 = vmatpush1.msra.mxu0 %v375
        %377 = vmatprep.subr.mxu0 0.0
        %v378 = vand.u32 %v153, 4294901760
        %v379 = vsub.f32 %v153, %v378
        %380 = vmatpush1.msra.mxu0 %v379
        %381 = vmatprep.subr.mxu0 0.0
        %382 = vmatpush1.msra.mxu0 0.0
        %383 = vmatprep.subr.mxu0 0.0
        %384 = vmatpush1.msra.mxu0 0.0
        %385 = vmatprep.subr.mxu0 0.0
        %386 = vmatpush1.msra.mxu0 0.0
        %387 = vmatprep.subr.mxu0 0.0
        %388 = vmatpush1.msra.mxu0 0.0
        %389 = vmatprep.subr.mxu0 0.0
        %390 = vmatpush1.msra.mxu0 0.0
        %391 = vmatprep.subr.mxu0 0.0
        %392 = vmatpush1.msra.mxu0 0.0
        %393 = vmatprep.subr.mxu0 0.0
        %394 = vmatpush1.msra.mxu0 0.0
        %395 = vmatprep.subr.mxu0 0.0
        %396 = vmatpush1.msra.mxu0 0.0
        %397 = vmatprep.subr.mxu0 0.0
        %398 = vmatpush1.msra.mxu0 0.0
        %399 = vmatprep.subr.mxu0 0.0
        %400 = vmatpush1.msra.mxu0 0.0
        %401 = vmatprep.subr.mxu0 0.0
        %402 = vmatpush1.msra.mxu0 0.0
        %403 = vmatprep.subr.mxu0 0.0
        %404 = vmatpush1.msra.mxu0 0.0
        %405 = vmatprep.subr.mxu0 0.0
        %406 = vmatpush1.msra.mxu0 0.0
        %407 = vmatprep.subr.mxu0 0.0
        %408 = vmatpush1.msra.mxu0 0.0
        %409 = vmatprep.subr.mxu0 0.0
        %410 = vmatpush1.msra.mxu0 0.0
        %411 = vmatprep.subr.mxu0 0.0
        %412 = vmatpush1.msra.mxu0 0.0
        %413 = vmatprep.subr.mxu0 0.0
        %414 = vmatpush1.msra.mxu0 0.0
        %415 = vmatprep.subr.mxu0 0.0
        %416 = vmatpush1.msra.mxu0 0.0
        %417 = vmatprep.subr.mxu0 0.0
        %418 = vmatpush1.msra.mxu0 0.0
        %419 = vmatprep.subr.mxu0 0.0
        %420 = vmatpush1.msra.mxu0 0.0
        %421 = vmatprep.subr.mxu0 0.0
        %422 = vmatpush1.msra.mxu0 0.0
        %423 = vmatprep.subr.mxu0 0.0
        %424 = vmatpush1.msra.mxu0 0.0
        %425 = vmatprep.subr.mxu0 0.0
        %426 = vmatpush1.msra.mxu0 0.0
        %427 = vmatprep.subr.mxu0 0.0
        %428 = vmatpush1.msra.mxu0 0.0
        %429 = vmatprep.subr.mxu0 0.0
        %430 = vmatpush1.msra.mxu0 0.0
        %431 = vmatprep.subr.mxu0 0.0
        %432 = vmatpush1.msra.mxu0 0.0
        %433 = vmatprep.subr.mxu0 0.0
        %434 = vmatpush1.msra.mxu0 0.0
        %435 = vmatprep.subr.mxu0 0.0
        %436 = vmatpush1.msra.mxu0 0.0
        %437 = vmatprep.subr.mxu0 0.0
        %438 = vmatpush1.msra.mxu0 0.0
        %439 = vmatprep.subr.mxu0 0.0
        %440 = vmatpush1.msra.mxu0 0.0
        %441 = vmatprep.mubr.f32.mxu0 0.0
        %v442 = vand.u32 %v156, 4294901760
        %v443 = vsub.f32 %v156, %v442
        %444 = vmatmul.mubr.f32.gmra.mrb[0].mxu0 %v443
        %v445 = vpop.f32.mrb[0].mxu0
        %v446 = vadd.f32 %v352, %v445
        %v447 = vpop.f32.mrb[0].mxu0
        %448 = vmatprep.mubr.f32.mxu0 0.0
        %v449 = vand.u32 %v159, 4294901760
        %v450 = vsub.f32 %v159, %v449
        %451 = vmatmul.mubr.f32.gmra.mrb[0].mxu0 %v450
        %v452 = vpop.f32.mrb[0].mxu0
        %v453 = vadd.f32 %v358, %v452
        %v454 = vpop.f32.mrb[0].mxu0
        %455 = vmatprep.mubr.f32.mxu0 0.0
        %v456 = vand.u32 %v162, 4294901760
        %v457 = vsub.f32 %v162, %v456
        %458 = vmatmul.mubr.f32.gmra.mrb[0].mxu0 %v457
        %v459 = vpop.f32.mrb[0].mxu0
        %v460 = vadd.f32 %v364, %v459
        %v461 = vpop.f32.mrb[0].mxu0
        %462 = vmatprep.mubr.f32.mxu0 0.0
        %v463 = vand.u32 %v165, 4294901760
        %v464 = vsub.f32 %v165, %v463
        %465 = vmatmul.mubr.f32.gmra.mrb[0].mxu0 %v464
        %v466 = vpop.f32.mrb[0].mxu0
        %v467 = vadd.f32 %v370, %v466
        %v468 = vpop.f32.mrb[0].mxu0
        %469 = vdwg.mxu0
        %470 = vmatprep.subr.mxu0 0.0
        %v471 = vand.u32 %v152, 4294901760
        %472 = vmatpush1.msra.mxu0 %v471
        %473 = vmatprep.subr.mxu0 0.0
        %v474 = vand.u32 %v153, 4294901760
        %475 = vmatpush1.msra.mxu0 %v474
        %476 = vmatprep.subr.mxu0 0.0
        %477 = vmatpush1.msra.mxu0 0.0
        %478 = vmatprep.subr.mxu0 0.0
        %479 = vmatpush1.msra.mxu0 0.0
        %480 = vmatprep.subr.mxu0 0.0
        %481 = vmatpush1.msra.mxu0 0.0
        %482 = vmatprep.subr.mxu0 0.0
        %483 = vmatpush1.msra.mxu0 0.0
        %484 = vmatprep.subr.mxu0 0.0
        %485 = vmatpush1.msra.mxu0 0.0
        %486 = vmatprep.subr.mxu0 0.0
        %487 = vmatpush1.msra.mxu0 0.0
        %488 = vmatprep.subr.mxu0 0.0
        %489 = vmatpush1.msra.mxu0 0.0
        %490 = vmatprep.subr.mxu0 0.0
        %491 = vmatpush1.msra.mxu0 0.0
        %492 = vmatprep.subr.mxu0 0.0
        %493 = vmatpush1.msra.mxu0 0.0
        %494 = vmatprep.subr.mxu0 0.0
        %495 = vmatpush1.msra.mxu0 0.0
        %496 = vmatprep.subr.mxu0 0.0
        %497 = vmatpush1.msra.mxu0 0.0
        %498 = vmatprep.subr.mxu0 0.0
        %499 = vmatpush1.msra.mxu0 0.0
        %500 = vmatprep.subr.mxu0 0.0
        %501 = vmatpush1.msra.mxu0 0.0
        %502 = vmatprep.subr.mxu0 0.0
        %503 = vmatpush1.msra.mxu0 0.0
        %504 = vmatprep.subr.mxu0 0.0
        %505 = vmatpush1.msra.mxu0 0.0
        %506 = vmatprep.subr.mxu0 0.0
        %507 = vmatpush1.msra.mxu0 0.0
        %508 = vmatprep.subr.mxu0 0.0
        %509 = vmatpush1.msra.mxu0 0.0
        %510 = vmatprep.subr.mxu0 0.0
        %511 = vmatpush1.msra.mxu0 0.0
        %512 = vmatprep.subr.mxu0 0.0
        %513 = vmatpush1.msra.mxu0 0.0
        %514 = vmatprep.subr.mxu0 0.0
        %515 = vmatpush1.msra.mxu0 0.0
        %516 = vmatprep.subr.mxu0 0.0
        %517 = vmatpush1.msra.mxu0 0.0
        %518 = vmatprep.subr.mxu0 0.0
        %519 = vmatpush1.msra.mxu0 0.0
        %520 = vmatprep.subr.mxu0 0.0
        %521 = vmatpush1.msra.mxu0 0.0
        %522 = vmatprep.subr.mxu0 0.0
        %523 = vmatpush1.msra.mxu0 0.0
        %524 = vmatprep.subr.mxu0 0.0
        %525 = vmatpush1.msra.mxu0 0.0
        %526 = vmatprep.subr.mxu0 0.0
        %527 = vmatpush1.msra.mxu0 0.0
        %528 = vmatprep.subr.mxu0 0.0
        %529 = vmatpush1.msra.mxu0 0.0
        %530 = vmatprep.subr.mxu0 0.0
        %531 = vmatpush1.msra.mxu0 0.0
        %532 = vmatprep.subr.mxu0 0.0
        %533 = vmatpush1.msra.mxu0 0.0
        %534 = vmatprep.subr.mxu0 0.0
        %535 = vmatpush1.msra.mxu0 0.0
        %536 = vmatprep.mubr.f32.mxu0 0.0
        %v537 = vand.u32 %v156, 4294901760
        %v538 = vsub.f32 %v156, %v537
        %v539 = vand.u32 %v538, 4294901760
        %540 = vmatmul.mubr.f32.gmra.mrb[0].mxu0 %v539
        %v541 = vpop.f32.mrb[0].mxu0
        %v542 = vadd.f32 %v446, %v541
        %v543 = vpop.f32.mrb[0].mxu0
        %544 = vmatprep.mubr.f32.mxu0 0.0
        %v545 = vand.u32 %v159, 4294901760
        %v546 = vsub.f32 %v159, %v545
        %v547 = vand.u32 %v546, 4294901760
        %548 = vmatmul.mubr.f32.gmra.mrb[0].mxu0 %v547
        %v549 = vpop.f32.mrb[0].mxu0
        %v550 = vadd.f32 %v453, %v549
        %v551 = vpop.f32.mrb[0].mxu0
        %552 = vmatprep.mubr.f32.mxu0 0.0
        %v553 = vand.u32 %v162, 4294901760
        %v554 = vsub.f32 %v162, %v553
        %v555 = vand.u32 %v554, 4294901760
        %556 = vmatmul.mubr.f32.gmra.mrb[0].mxu0 %v555
        %v557 = vpop.f32.mrb[0].mxu0
        %v558 = vadd.f32 %v460, %v557
        %v559 = vpop.f32.mrb[0].mxu0
        %560 = vmatprep.mubr.f32.mxu0 0.0
        %v561 = vand.u32 %v165, 4294901760
        %v562 = vsub.f32 %v165, %v561
        %v563 = vand.u32 %v562, 4294901760
        %564 = vmatmul.mubr.f32.gmra.mrb[0].mxu0 %v563
        %v565 = vpop.f32.mrb[0].mxu0
        %v566 = vadd.f32 %v467, %v565
        %v567 = vpop.f32.mrb[0].mxu0
        %568 = vdwg.mxu0
        %569 = vmatprep.subr.mxu0 0.0
        %v570 = vand.u32 %v152, 4294901760
        %v571 = vsub.f32 %v152, %v570
        %v572 = vand.u32 %v571, 4294901760
        %573 = vmatpush1.msra.mxu0 %v572
        %574 = vmatprep.subr.mxu0 0.0
        %v575 = vand.u32 %v153, 4294901760
        %v576 = vsub.f32 %v153, %v575
        %v577 = vand.u32 %v576, 4294901760
        %578 = vmatpush1.msra.mxu0 %v577
        %579 = vmatprep.subr.mxu0 0.0
        %580 = vmatpush1.msra.mxu0 0.0
        %581 = vmatprep.subr.mxu0 0.0
        %582 = vmatpush1.msra.mxu0 0.0
        %583 = vmatprep.subr.mxu0 0.0
        %584 = vmatpush1.msra.mxu0 0.0
        %585 = vmatprep.subr.mxu0 0.0
        %586 = vmatpush1.msra.mxu0 0.0
        %587 = vmatprep.subr.mxu0 0.0
        %588 = vmatpush1.msra.mxu0 0.0
        %589 = vmatprep.subr.mxu0 0.0
        %590 = vmatpush1.msra.mxu0 0.0
        %591 = vmatprep.subr.mxu0 0.0
        %592 = vmatpush1.msra.mxu0 0.0
        %593 = vmatprep.subr.mxu0 0.0
        %594 = vmatpush1.msra.mxu0 0.0
        %595 = vmatprep.subr.mxu0 0.0
        %596 = vmatpush1.msra.mxu0 0.0
        %597 = vmatprep.subr.mxu0 0.0
        %598 = vmatpush1.msra.mxu0 0.0
        %599 = vmatprep.subr.mxu0 0.0
        %600 = vmatpush1.msra.mxu0 0.0
        %601 = vmatprep.subr.mxu0 0.0
        %602 = vmatpush1.msra.mxu0 0.0
        %603 = vmatprep.subr.mxu0 0.0
        %604 = vmatpush1.msra.mxu0 0.0
        %605 = vmatprep.subr.mxu0 0.0
        %606 = vmatpush1.msra.mxu0 0.0
        %607 = vmatprep.subr.mxu0 0.0
        %608 = vmatpush1.msra.mxu0 0.0
        %609 = vmatprep.subr.mxu0 0.0
        %610 = vmatpush1.msra.mxu0 0.0
        %611 = vmatprep.subr.mxu0 0.0
        %612 = vmatpush1.msra.mxu0 0.0
        %613 = vmatprep.subr.mxu0 0.0
        %614 = vmatpush1.msra.mxu0 0.0
        %615 = vmatprep.subr.mxu0 0.0
        %616 = vmatpush1.msra.mxu0 0.0
        %617 = vmatprep.subr.mxu0 0.0
        %618 = vmatpush1.msra.mxu0 0.0
        %619 = vmatprep.subr.mxu0 0.0
        %620 = vmatpush1.msra.mxu0 0.0
        %621 = vmatprep.subr.mxu0 0.0
        %622 = vmatpush1.msra.mxu0 0.0
        %623 = vmatprep.subr.mxu0 0.0
        %624 = vmatpush1.msra.mxu0 0.0
        %625 = vmatprep.subr.mxu0 0.0
        %626 = vmatpush1.msra.mxu0 0.0
        %627 = vmatprep.subr.mxu0 0.0
        %628 = vmatpush1.msra.mxu0 0.0
        %629 = vmatprep.subr.mxu0 0.0
        %630 = vmatpush1.msra.mxu0 0.0
        %631 = vmatprep.subr.mxu0 0.0
        %632 = vmatpush1.msra.mxu0 0.0
        %633 = vmatprep.subr.mxu0 0.0
        %634 = vmatpush1.msra.mxu0 0.0
        %635 = vmatprep.subr.mxu0 0.0
        %636 = vmatpush1.msra.mxu0 0.0
        %637 = vmatprep.subr.mxu0 0.0
        %638 = vmatpush1.msra.mxu0 0.0
        %639 = vmatprep.mubr.f32.mxu0 0.0
        %v640 = vand.u32 %v156, 4294901760
        %641 = vmatmul.mubr.f32.gmra.mrb[0].mxu0 %v640
        %v642 = vpop.f32.mrb[0].mxu0
        %v643 = vadd.f32 %v542, %v642
        %v644 = vpop.f32.mrb[0].mxu0
        %645 = vmatprep.mubr.f32.mxu0 0.0
        %v646 = vand.u32 %v159, 4294901760
        %647 = vmatmul.mubr.f32.gmra.mrb[0].mxu0 %v646
        %v648 = vpop.f32.mrb[0].mxu0
        %v649 = vadd.f32 %v550, %v648
        %v650 = vpop.f32.mrb[0].mxu0
        %651 = vmatprep.mubr.f32.mxu0 0.0
        %v652 = vand.u32 %v162, 4294901760
        %653 = vmatmul.mubr.f32.gmra.mrb[0].mxu0 %v652
        %v654 = vpop.f32.mrb[0].mxu0
        %v655 = vadd.f32 %v558, %v654
        %v656 = vpop.f32.mrb[0].mxu0
        %657 = vmatprep.mubr.f32.mxu0 0.0
        %v658 = vand.u32 %v165, 4294901760
        %659 = vmatmul.mubr.f32.gmra.mrb[0].mxu0 %v658
        %v660 = vpop.f32.mrb[0].mxu0
        %v661 = vadd.f32 %v566, %v660
        %v662 = vpop.f32.mrb[0].mxu0
        %663 = vdwg.mxu0
        %664 = vmatprep.subr.mxu0 0.0
        %v665 = vand.u32 %v152, 4294901760
        %666 = vmatpush1.msra.mxu0 %v665
        %667 = vmatprep.subr.mxu0 0.0
        %v668 = vand.u32 %v153, 4294901760
        %669 = vmatpush1.msra.mxu0 %v668
        %670 = vmatprep.subr.mxu0 0.0
        %671 = vmatpush1.msra.mxu0 0.0
        %672 = vmatprep.subr.mxu0 0.0
        %673 = vmatpush1.msra.mxu0 0.0
        %674 = vmatprep.subr.mxu0 0.0
        %675 = vmatpush1.msra.mxu0 0.0
        %676 = vmatprep.subr.mxu0 0.0
        %677 = vmatpush1.msra.mxu0 0.0
        %678 = vmatprep.subr.mxu0 0.0
        %679 = vmatpush1.msra.mxu0 0.0
        %680 = vmatprep.subr.mxu0 0.0
        %681 = vmatpush1.msra.mxu0 0.0
        %682 = vmatprep.subr.mxu0 0.0
        %683 = vmatpush1.msra.mxu0 0.0
        %684 = vmatprep.subr.mxu0 0.0
        %685 = vmatpush1.msra.mxu0 0.0
        %686 = vmatprep.subr.mxu0 0.0
        %687 = vmatpush1.msra.mxu0 0.0
        %688 = vmatprep.subr.mxu0 0.0
        %689 = vmatpush1.msra.mxu0 0.0
        %690 = vmatprep.subr.mxu0 0.0
        %691 = vmatpush1.msra.mxu0 0.0
        %692 = vmatprep.subr.mxu0 0.0
        %693 = vmatpush1.msra.mxu0 0.0
        %694 = vmatprep.subr.mxu0 0.0
        %695 = vmatpush1.msra.mxu0 0.0
        %696 = vmatprep.subr.mxu0 0.0
        %697 = vmatpush1.msra.mxu0 0.0
        %698 = vmatprep.subr.mxu0 0.0
        %699 = vmatpush1.msra.mxu0 0.0
        %700 = vmatprep.subr.mxu0 0.0
        %701 = vmatpush1.msra.mxu0 0.0
        %702 = vmatprep.subr.mxu0 0.0
        %703 = vmatpush1.msra.mxu0 0.0
        %704 = vmatprep.subr.mxu0 0.0
        %705 = vmatpush1.msra.mxu0 0.0
        %706 = vmatprep.subr.mxu0 0.0
        %707 = vmatpush1.msra.mxu0 0.0
        %708 = vmatprep.subr.mxu0 0.0
        %709 = vmatpush1.msra.mxu0 0.0
        %710 = vmatprep.subr.mxu0 0.0
        %711 = vmatpush1.msra.mxu0 0.0
        %712 = vmatprep.subr.mxu0 0.0
        %713 = vmatpush1.msra.mxu0 0.0
        %714 = vmatprep.subr.mxu0 0.0
        %715 = vmatpush1.msra.mxu0 0.0
        %716 = vmatprep.subr.mxu0 0.0
        %717 = vmatpush1.msra.mxu0 0.0
        %718 = vmatprep.subr.mxu0 0.0
        %719 = vmatpush1.msra.mxu0 0.0
        %720 = vmatprep.subr.mxu0 0.0
        %721 = vmatpush1.msra.mxu0 0.0
        %722 = vmatprep.subr.mxu0 0.0
        %723 = vmatpush1.msra.mxu0 0.0
        %724 = vmatprep.subr.mxu0 0.0
        %725 = vmatpush1.msra.mxu0 0.0
        %726 = vmatprep.subr.mxu0 0.0
        %727 = vmatpush1.msra.mxu0 0.0
        %728 = vmatprep.subr.mxu0 0.0
        %729 = vmatpush1.msra.mxu0 0.0
        %730 = vmatprep.mubr.f32.mxu0 0.0
        %v731 = vand.u32 %v156, 4294901760
        %732 = vmatmul.mubr.f32.gmra.mrb[0].mxu0 %v731
        %v733 = vpop.f32.mrb[0].mxu0
        %v734 = vadd.f32 %v643, %v733
        %v735 = vpop.f32.mrb[0].mxu0
        %736 = vmatprep.mubr.f32.mxu0 0.0
        %v737 = vand.u32 %v159, 4294901760
        %738 = vmatmul.mubr.f32.gmra.mrb[0].mxu0 %v737
        %v739 = vpop.f32.mrb[0].mxu0
        %v740 = vadd.f32 %v649, %v739
        %v741 = vpop.f32.mrb[0].mxu0
        %742 = vmatprep.mubr.f32.mxu0 0.0
        %v743 = vand.u32 %v162, 4294901760
        %744 = vmatmul.mubr.f32.gmra.mrb[0].mxu0 %v743
        %v745 = vpop.f32.mrb[0].mxu0
        %v746 = vadd.f32 %v655, %v745
        %v747 = vpop.f32.mrb[0].mxu0
        %748 = vmatprep.mubr.f32.mxu0 0.0
        %v749 = vand.u32 %v165, 4294901760
        %750 = vmatmul.mubr.f32.gmra.mrb[0].mxu0 %v749
        %v751 = vpop.f32.mrb[0].mxu0
        %v752 = vadd.f32 %v661, %v751
        %v753 = vpop.f32.mrb[0].mxu0
        %754 = vdwg.mxu0
        %vm755 = vcmask 64512
        %756 = vst.msk [vmem:[%s137] sm:$0xff] %vm755, %v734
        %757 = vst.msk [vmem:[%s137 + $0x20] sm:$0xff] %vm755, %v740
        %758 = vst.msk [vmem:[%s137 + $0x40] sm:$0xff] %vm755, %v746
        %759 = vst.msk [vmem:[%s137 + $0x60] sm:$0xff] %vm755, %v752
        %s760 = scalar_lea.vmem %s1, 16
        %v761 = vld [vmem:[%s760] sm:$0xff]
        %v762 = vld [vmem:[%s760 + $0x8] sm:$0xff]
        %763 = vmatprep.subr.mxu0 0.0
        %v764 = vand.u32 %v761, 4294901760
        %765 = vmatpush1.msra.mxu0 %v764
        %766 = vmatprep.subr.mxu0 0.0
        %v767 = vand.u32 %v762, 4294901760
        %768 = vmatpush1.msra.mxu0 %v767
        %769 = vmatprep.subr.mxu0 0.0
        %770 = vmatpush1.msra.mxu0 0.0
        %771 = vmatprep.subr.mxu0 0.0
        %772 = vmatpush1.msra.mxu0 0.0
        %773 = vmatprep.subr.mxu0 0.0
        %774 = vmatpush1.msra.mxu0 0.0
        %775 = vmatprep.subr.mxu0 0.0
        %776 = vmatpush1.msra.mxu0 0.0
        %777 = vmatprep.subr.mxu0 0.0
        %778 = vmatpush1.msra.mxu0 0.0
        %779 = vmatprep.subr.mxu0 0.0
        %780 = vmatpush1.msra.mxu0 0.0
        %781 = vmatprep.subr.mxu0 0.0
        %782 = vmatpush1.msra.mxu0 0.0
        %783 = vmatprep.subr.mxu0 0.0
        %784 = vmatpush1.msra.mxu0 0.0
        %785 = vmatprep.subr.mxu0 0.0
        %786 = vmatpush1.msra.mxu0 0.0
        %787 = vmatprep.subr.mxu0 0.0
        %788 = vmatpush1.msra.mxu0 0.0
        %789 = vmatprep.subr.mxu0 0.0
        %790 = vmatpush1.msra.mxu0 0.0
        %791 = vmatprep.subr.mxu0 0.0
        %792 = vmatpush1.msra.mxu0 0.0
        %793 = vmatprep.subr.mxu0 0.0
        %794 = vmatpush1.msra.mxu0 0.0
        %795 = vmatprep.subr.mxu0 0.0
        %796 = vmatpush1.msra.mxu0 0.0
        %797 = vmatprep.subr.mxu0 0.0
        %798 = vmatpush1.msra.mxu0 0.0
        %799 = vmatprep.subr.mxu0 0.0
        %800 = vmatpush1.msra.mxu0 0.0
        %801 = vmatprep.subr.mxu0 0.0
        %802 = vmatpush1.msra.mxu0 0.0
        %803 = vmatprep.subr.mxu0 0.0
        %804 = vmatpush1.msra.mxu0 0.0
        %805 = vmatprep.subr.mxu0 0.0
        %806 = vmatpush1.msra.mxu0 0.0
        %807 = vmatprep.subr.mxu0 0.0
        %808 = vmatpush1.msra.mxu0 0.0
        %809 = vmatprep.subr.mxu0 0.0
        %810 = vmatpush1.msra.mxu0 0.0
        %811 = vmatprep.subr.mxu0 0.0
        %812 = vmatpush1.msra.mxu0 0.0
        %813 = vmatprep.subr.mxu0 0.0
        %814 = vmatpush1.msra.mxu0 0.0
        %815 = vmatprep.subr.mxu0 0.0
        %816 = vmatpush1.msra.mxu0 0.0
        %817 = vmatprep.subr.mxu0 0.0
        %818 = vmatpush1.msra.mxu0 0.0
        %819 = vmatprep.subr.mxu0 0.0
        %820 = vmatpush1.msra.mxu0 0.0
        %821 = vmatprep.subr.mxu0 0.0
        %822 = vmatpush1.msra.mxu0 0.0
        %823 = vmatprep.subr.mxu0 0.0
        %824 = vmatpush1.msra.mxu0 0.0
        %825 = vmatprep.subr.mxu0 0.0
        %826 = vmatpush1.msra.mxu0 0.0
        %827 = vmatprep.subr.mxu0 0.0
        %828 = vmatpush1.msra.mxu0 0.0
        %829 = vmatprep.mubr.f32.mxu0 0.0
        %v830 = vand.u32 %v156, 4294901760
        %v831 = vsub.f32 %v156, %v830
        %v832 = vand.u32 %v831, 4294901760
        %v833 = vsub.f32 %v831, %v832
        %v834 = vand.u32 %v833, 4294901760
        %835 = vmatmul.mubr.f32.gmra.mrb[0].mxu0 %v834
        %v836 = vpop.f32.mrb[0].mxu0
        %v837 = vadd.f32 0.0, %v836
        %v838 = vpop.f32.mrb[0].mxu0
        %839 = vmatprep.mubr.f32.mxu0 0.0
        %v840 = vand.u32 %v159, 4294901760
        %v841 = vsub.f32 %v159, %v840
        %v842 = vand.u32 %v841, 4294901760
        %v843 = vsub.f32 %v841, %v842
        %v844 = vand.u32 %v843, 4294901760
        %845 = vmatmul.mubr.f32.gmra.mrb[0].mxu0 %v844
        %v846 = vpop.f32.mrb[0].mxu0
        %v847 = vadd.f32 0.0, %v846
        %v848 = vpop.f32.mrb[0].mxu0
        %849 = vmatprep.mubr.f32.mxu0 0.0
        %v850 = vand.u32 %v162, 4294901760
        %v851 = vsub.f32 %v162, %v850
        %v852 = vand.u32 %v851, 4294901760
        %v853 = vsub.f32 %v851, %v852
        %v854 = vand.u32 %v853, 4294901760
        %855 = vmatmul.mubr.f32.gmra.mrb[0].mxu0 %v854
        %v856 = vpop.f32.mrb[0].mxu0
        %v857 = vadd.f32 0.0, %v856
        %v858 = vpop.f32.mrb[0].mxu0
        %859 = vmatprep.mubr.f32.mxu0 0.0
        %v860 = vand.u32 %v165, 4294901760
        %v861 = vsub.f32 %v165, %v860
        %v862 = vand.u32 %v861, 4294901760
        %v863 = vsub.f32 %v861, %v862
        %v864 = vand.u32 %v863, 4294901760
        %865 = vmatmul.mubr.f32.gmra.mrb[0].mxu0 %v864
        %v866 = vpop.f32.mrb[0].mxu0
        %v867 = vadd.f32 0.0, %v866
        %v868 = vpop.f32.mrb[0].mxu0
        %869 = vdwg.mxu0
        %870 = vmatprep.subr.mxu0 0.0
        %v871 = vand.u32 %v761, 4294901760
        %v872 = vsub.f32 %v761, %v871
        %v873 = vand.u32 %v872, 4294901760
        %v874 = vsub.f32 %v872, %v873
        %v875 = vand.u32 %v874, 4294901760
        %876 = vmatpush1.msra.mxu0 %v875
        %877 = vmatprep.subr.mxu0 0.0
        %v878 = vand.u32 %v762, 4294901760
        %v879 = vsub.f32 %v762, %v878
        %v880 = vand.u32 %v879, 4294901760
        %v881 = vsub.f32 %v879, %v880
        %v882 = vand.u32 %v881, 4294901760
        %883 = vmatpush1.msra.mxu0 %v882
        %884 = vmatprep.subr.mxu0 0.0
        %885 = vmatpush1.msra.mxu0 0.0
        %886 = vmatprep.subr.mxu0 0.0
        %887 = vmatpush1.msra.mxu0 0.0
        %888 = vmatprep.subr.mxu0 0.0
        %889 = vmatpush1.msra.mxu0 0.0
        %890 = vmatprep.subr.mxu0 0.0
        %891 = vmatpush1.msra.mxu0 0.0
        %892 = vmatprep.subr.mxu0 0.0
        %893 = vmatpush1.msra.mxu0 0.0
        %894 = vmatprep.subr.mxu0 0.0
        %895 = vmatpush1.msra.mxu0 0.0
        %896 = vmatprep.subr.mxu0 0.0
        %897 = vmatpush1.msra.mxu0 0.0
        %898 = vmatprep.subr.mxu0 0.0
        %899 = vmatpush1.msra.mxu0 0.0
        %900 = vmatprep.subr.mxu0 0.0
        %901 = vmatpush1.msra.mxu0 0.0
        %902 = vmatprep.subr.mxu0 0.0
        %903 = vmatpush1.msra.mxu0 0.0
        %904 = vmatprep.subr.mxu0 0.0
        %905 = vmatpush1.msra.mxu0 0.0
        %906 = vmatprep.subr.mxu0 0.0
        %907 = vmatpush1.msra.mxu0 0.0
        %908 = vmatprep.subr.mxu0 0.0
        %909 = vmatpush1.msra.mxu0 0.0
        %910 = vmatprep.subr.mxu0 0.0
        %911 = vmatpush1.msra.mxu0 0.0
        %912 = vmatprep.subr.mxu0 0.0
        %913 = vmatpush1.msra.mxu0 0.0
        %914 = vmatprep.subr.mxu0 0.0
        %915 = vmatpush1.msra.mxu0 0.0
        %916 = vmatprep.subr.mxu0 0.0
        %917 = vmatpush1.msra.mxu0 0.0
        %918 = vmatprep.subr.mxu0 0.0
        %919 = vmatpush1.msra.mxu0 0.0
        %920 = vmatprep.subr.mxu0 0.0
        %921 = vmatpush1.msra.mxu0 0.0
        %922 = vmatprep.subr.mxu0 0.0
        %923 = vmatpush1.msra.mxu0 0.0
        %924 = vmatprep.subr.mxu0 0.0
        %925 = vmatpush1.msra.mxu0 0.0
        %926 = vmatprep.subr.mxu0 0.0
        %927 = vmatpush1.msra.mxu0 0.0
        %928 = vmatprep.subr.mxu0 0.0
        %929 = vmatpush1.msra.mxu0 0.0
        %930 = vmatprep.subr.mxu0 0.0
        %931 = vmatpush1.msra.mxu0 0.0
        %932 = vmatprep.subr.mxu0 0.0
        %933 = vmatpush1.msra.mxu0 0.0
        %934 = vmatprep.subr.mxu0 0.0
        %935 = vmatpush1.msra.mxu0 0.0
        %936 = vmatprep.subr.mxu0 0.0
        %937 = vmatpush1.msra.mxu0 0.0
        %938 = vmatprep.subr.mxu0 0.0
        %939 = vmatpush1.msra.mxu0 0.0
        %940 = vmatprep.subr.mxu0 0.0
        %941 = vmatpush1.msra.mxu0 0.0
        %942 = vmatprep.subr.mxu0 0.0
        %943 = vmatpush1.msra.mxu0 0.0
        %944 = vmatprep.mubr.f32.mxu0 0.0
        %v945 = vand.u32 %v156, 4294901760
        %946 = vmatmul.mubr.f32.gmra.mrb[0].mxu0 %v945
        %v947 = vpop.f32.mrb[0].mxu0
        %v948 = vadd.f32 %v837, %v947
        %v949 = vpop.f32.mrb[0].mxu0
        %950 = vmatprep.mubr.f32.mxu0 0.0
        %v951 = vand.u32 %v159, 4294901760
        %952 = vmatmul.mubr.f32.gmra.mrb[0].mxu0 %v951
        %v953 = vpop.f32.mrb[0].mxu0
        %v954 = vadd.f32 %v847, %v953
        %v955 = vpop.f32.mrb[0].mxu0
        %956 = vmatprep.mubr.f32.mxu0 0.0
        %v957 = vand.u32 %v162, 4294901760
        %958 = vmatmul.mubr.f32.gmra.mrb[0].mxu0 %v957
        %v959 = vpop.f32.mrb[0].mxu0
        %v960 = vadd.f32 %v857, %v959
        %v961 = vpop.f32.mrb[0].mxu0
        %962 = vmatprep.mubr.f32.mxu0 0.0
        %v963 = vand.u32 %v165, 4294901760
        %964 = vmatmul.mubr.f32.gmra.mrb[0].mxu0 %v963
        %v965 = vpop.f32.mrb[0].mxu0
        %v966 = vadd.f32 %v867, %v965
        %v967 = vpop.f32.mrb[0].mxu0
        %968 = vdwg.mxu0
        %969 = vmatprep.subr.mxu0 0.0
        %v970 = vand.u32 %v761, 4294901760
        %v971 = vsub.f32 %v761, %v970
        %972 = vmatpush1.msra.mxu0 %v971
        %973 = vmatprep.subr.mxu0 0.0
        %v974 = vand.u32 %v762, 4294901760
        %v975 = vsub.f32 %v762, %v974
        %976 = vmatpush1.msra.mxu0 %v975
        %977 = vmatprep.subr.mxu0 0.0
        %978 = vmatpush1.msra.mxu0 0.0
        %979 = vmatprep.subr.mxu0 0.0
        %980 = vmatpush1.msra.mxu0 0.0
        %981 = vmatprep.subr.mxu0 0.0
        %982 = vmatpush1.msra.mxu0 0.0
        %983 = vmatprep.subr.mxu0 0.0
        %984 = vmatpush1.msra.mxu0 0.0
        %985 = vmatprep.subr.mxu0 0.0
        %986 = vmatpush1.msra.mxu0 0.0
        %987 = vmatprep.subr.mxu0 0.0
        %988 = vmatpush1.msra.mxu0 0.0
        %989 = vmatprep.subr.mxu0 0.0
        %990 = vmatpush1.msra.mxu0 0.0
        %991 = vmatprep.subr.mxu0 0.0
        %992 = vmatpush1.msra.mxu0 0.0
        %993 = vmatprep.subr.mxu0 0.0
        %994 = vmatpush1.msra.mxu0 0.0
        %995 = vmatprep.subr.mxu0 0.0
        %996 = vmatpush1.msra.mxu0 0.0
        %997 = vmatprep.subr.mxu0 0.0
        %998 = vmatpush1.msra.mxu0 0.0
        %999 = vmatprep.subr.mxu0 0.0
        %1000 = vmatpush1.msra.mxu0 0.0
        %1001 = vmatprep.subr.mxu0 0.0
        %1002 = vmatpush1.msra.mxu0 0.0
        %1003 = vmatprep.subr.mxu0 0.0
        %1004 = vmatpush1.msra.mxu0 0.0
        %1005 = vmatprep.subr.mxu0 0.0
        %1006 = vmatpush1.msra.mxu0 0.0
        %1007 = vmatprep.subr.mxu0 0.0
        %1008 = vmatpush1.msra.mxu0 0.0
        %1009 = vmatprep.subr.mxu0 0.0
        %1010 = vmatpush1.msra.mxu0 0.0
        %1011 = vmatprep.subr.mxu0 0.0
        %1012 = vmatpush1.msra.mxu0 0.0
        %1013 = vmatprep.subr.mxu0 0.0
        %1014 = vmatpush1.msra.mxu0 0.0
        %1015 = vmatprep.subr.mxu0 0.0
        %1016 = vmatpush1.msra.mxu0 0.0
        %1017 = vmatprep.subr.mxu0 0.0
        %1018 = vmatpush1.msra.mxu0 0.0
        %1019 = vmatprep.subr.mxu0 0.0
        %1020 = vmatpush1.msra.mxu0 0.0
        %1021 = vmatprep.subr.mxu0 0.0
        %1022 = vmatpush1.msra.mxu0 0.0
        %1023 = vmatprep.subr.mxu0 0.0
        %1024 = vmatpush1.msra.mxu0 0.0
        %1025 = vmatprep.subr.mxu0 0.0
        %1026 = vmatpush1.msra.mxu0 0.0
        %1027 = vmatprep.subr.mxu0 0.0
        %1028 = vmatpush1.msra.mxu0 0.0
        %1029 = vmatprep.subr.mxu0 0.0
        %1030 = vmatpush1.msra.mxu0 0.0
        %1031 = vmatprep.subr.mxu0 0.0
        %1032 = vmatpush1.msra.mxu0 0.0
        %1033 = vmatprep.subr.mxu0 0.0
        %1034 = vmatpush1.msra.mxu0 0.0
        %1035 = vmatprep.subr.mxu0 0.0
        %1036 = vmatpush1.msra.mxu0 0.0
        %1037 = vmatprep.mubr.f32.mxu0 0.0
        %v1038 = vand.u32 %v156, 4294901760
        %v1039 = vsub.f32 %v156, %v1038
        %1040 = vmatmul.mubr.f32.gmra.mrb[0].mxu0 %v1039
        %v1041 = vpop.f32.mrb[0].mxu0
        %v1042 = vadd.f32 %v948, %v1041
        %v1043 = vpop.f32.mrb[0].mxu0
        %1044 = vmatprep.mubr.f32.mxu0 0.0
        %v1045 = vand.u32 %v159, 4294901760
        %v1046 = vsub.f32 %v159, %v1045
        %1047 = vmatmul.mubr.f32.gmra.mrb[0].mxu0 %v1046
        %v1048 = vpop.f32.mrb[0].mxu0
        %v1049 = vadd.f32 %v954, %v1048
        %v1050 = vpop.f32.mrb[0].mxu0
        %1051 = vmatprep.mubr.f32.mxu0 0.0
        %v1052 = vand.u32 %v162, 4294901760
        %v1053 = vsub.f32 %v162, %v1052
        %1054 = vmatmul.mubr.f32.gmra.mrb[0].mxu0 %v1053
        %v1055 = vpop.f32.mrb[0].mxu0
        %v1056 = vadd.f32 %v960, %v1055
        %v1057 = vpop.f32.mrb[0].mxu0
        %1058 = vmatprep.mubr.f32.mxu0 0.0
        %v1059 = vand.u32 %v165, 4294901760
        %v1060 = vsub.f32 %v165, %v1059
        %1061 = vmatmul.mubr.f32.gmra.mrb[0].mxu0 %v1060
        %v1062 = vpop.f32.mrb[0].mxu0
        %v1063 = vadd.f32 %v966, %v1062
        %v1064 = vpop.f32.mrb[0].mxu0
        %1065 = vdwg.mxu0
        %1066 = vmatprep.subr.mxu0 0.0
        %v1067 = vand.u32 %v761, 4294901760
        %1068 = vmatpush1.msra.mxu0 %v1067
        %1069 = vmatprep.subr.mxu0 0.0
        %v1070 = vand.u32 %v762, 4294901760
        %1071 = vmatpush1.msra.mxu0 %v1070
        %1072 = vmatprep.subr.mxu0 0.0
        %1073 = vmatpush1.msra.mxu0 0.0
        %1074 = vmatprep.subr.mxu0 0.0
        %1075 = vmatpush1.msra.mxu0 0.0
        %1076 = vmatprep.subr.mxu0 0.0
        %1077 = vmatpush1.msra.mxu0 0.0
        %1078 = vmatprep.subr.mxu0 0.0
        %1079 = vmatpush1.msra.mxu0 0.0
        %1080 = vmatprep.subr.mxu0 0.0
        %1081 = vmatpush1.msra.mxu0 0.0
        %1082 = vmatprep.subr.mxu0 0.0
        %1083 = vmatpush1.msra.mxu0 0.0
        %1084 = vmatprep.subr.mxu0 0.0
        %1085 = vmatpush1.msra.mxu0 0.0
        %1086 = vmatprep.subr.mxu0 0.0
        %1087 = vmatpush1.msra.mxu0 0.0
        %1088 = vmatprep.subr.mxu0 0.0
        %1089 = vmatpush1.msra.mxu0 0.0
        %1090 = vmatprep.subr.mxu0 0.0
        %1091 = vmatpush1.msra.mxu0 0.0
        %1092 = vmatprep.subr.mxu0 0.0
        %1093 = vmatpush1.msra.mxu0 0.0
        %1094 = vmatprep.subr.mxu0 0.0
        %1095 = vmatpush1.msra.mxu0 0.0
        %1096 = vmatprep.subr.mxu0 0.0
        %1097 = vmatpush1.msra.mxu0 0.0
        %1098 = vmatprep.subr.mxu0 0.0
        %1099 = vmatpush1.msra.mxu0 0.0
        %1100 = vmatprep.subr.mxu0 0.0
        %1101 = vmatpush1.msra.mxu0 0.0
        %1102 = vmatprep.subr.mxu0 0.0
        %1103 = vmatpush1.msra.mxu0 0.0
        %1104 = vmatprep.subr.mxu0 0.0
        %1105 = vmatpush1.msra.mxu0 0.0
        %1106 = vmatprep.subr.mxu0 0.0
        %1107 = vmatpush1.msra.mxu0 0.0
        %1108 = vmatprep.subr.mxu0 0.0
        %1109 = vmatpush1.msra.mxu0 0.0
        %1110 = vmatprep.subr.mxu0 0.0
        %1111 = vmatpush1.msra.mxu0 0.0
        %1112 = vmatprep.subr.mxu0 0.0
        %1113 = vmatpush1.msra.mxu0 0.0
        %1114 = vmatprep.subr.mxu0 0.0
        %1115 = vmatpush1.msra.mxu0 0.0
        %1116 = vmatprep.subr.mxu0 0.0
        %1117 = vmatpush1.msra.mxu0 0.0
        %1118 = vmatprep.subr.mxu0 0.0
        %1119 = vmatpush1.msra.mxu0 0.0
        %1120 = vmatprep.subr.mxu0 0.0
        %1121 = vmatpush1.msra.mxu0 0.0
        %1122 = vmatprep.subr.mxu0 0.0
        %1123 = vmatpush1.msra.mxu0 0.0
        %1124 = vmatprep.subr.mxu0 0.0
        %1125 = vmatpush1.msra.mxu0 0.0
        %1126 = vmatprep.subr.mxu0 0.0
        %1127 = vmatpush1.msra.mxu0 0.0
        %1128 = vmatprep.subr.mxu0 0.0
        %1129 = vmatpush1.msra.mxu0 0.0
        %1130 = vmatprep.subr.mxu0 0.0
        %1131 = vmatpush1.msra.mxu0 0.0
        %1132 = vmatprep.mubr.f32.mxu0 0.0
        %v1133 = vand.u32 %v156, 4294901760
        %v1134 = vsub.f32 %v156, %v1133
        %v1135 = vand.u32 %v1134, 4294901760
        %1136 = vmatmul.mubr.f32.gmra.mrb[0].mxu0 %v1135
        %v1137 = vpop.f32.mrb[0].mxu0
        %v1138 = vadd.f32 %v1042, %v1137
        %v1139 = vpop.f32.mrb[0].mxu0
        %1140 = vmatprep.mubr.f32.mxu0 0.0
        %v1141 = vand.u32 %v159, 4294901760
        %v1142 = vsub.f32 %v159, %v1141
        %v1143 = vand.u32 %v1142, 4294901760
        %1144 = vmatmul.mubr.f32.gmra.mrb[0].mxu0 %v1143
        %v1145 = vpop.f32.mrb[0].mxu0
        %v1146 = vadd.f32 %v1049, %v1145
        %v1147 = vpop.f32.mrb[0].mxu0
        %1148 = vmatprep.mubr.f32.mxu0 0.0
        %v1149 = vand.u32 %v162, 4294901760
        %v1150 = vsub.f32 %v162, %v1149
        %v1151 = vand.u32 %v1150, 4294901760
        %1152 = vmatmul.mubr.f32.gmra.mrb[0].mxu0 %v1151
        %v1153 = vpop.f32.mrb[0].mxu0
        %v1154 = vadd.f32 %v1056, %v1153
        %v1155 = vpop.f32.mrb[0].mxu0
        %1156 = vmatprep.mubr.f32.mxu0 0.0
        %v1157 = vand.u32 %v165, 4294901760
        %v1158 = vsub.f32 %v165, %v1157
        %v1159 = vand.u32 %v1158, 4294901760
        %1160 = vmatmul.mubr.f32.gmra.mrb[0].mxu0 %v1159
        %v1161 = vpop.f32.mrb[0].mxu0
        %v1162 = vadd.f32 %v1063, %v1161
        %v1163 = vpop.f32.mrb[0].mxu0
        %1164 = vdwg.mxu0
        %1165 = vmatprep.subr.mxu0 0.0
        %v1166 = vand.u32 %v761, 4294901760
        %v1167 = vsub.f32 %v761, %v1166
        %v1168 = vand.u32 %v1167, 4294901760
        %1169 = vmatpush1.msra.mxu0 %v1168
        %1170 = vmatprep.subr.mxu0 0.0
        %v1171 = vand.u32 %v762, 4294901760
        %v1172 = vsub.f32 %v762, %v1171
        %v1173 = vand.u32 %v1172, 4294901760
        %1174 = vmatpush1.msra.mxu0 %v1173
        %1175 = vmatprep.subr.mxu0 0.0
        %1176 = vmatpush1.msra.mxu0 0.0
        %1177 = vmatprep.subr.mxu0 0.0
        %1178 = vmatpush1.msra.mxu0 0.0
        %1179 = vmatprep.subr.mxu0 0.0
        %1180 = vmatpush1.msra.mxu0 0.0
        %1181 = vmatprep.subr.mxu0 0.0
        %1182 = vmatpush1.msra.mxu0 0.0
        %1183 = vmatprep.subr.mxu0 0.0
        %1184 = vmatpush1.msra.mxu0 0.0
        %1185 = vmatprep.subr.mxu0 0.0
        %1186 = vmatpush1.msra.mxu0 0.0
        %1187 = vmatprep.subr.mxu0 0.0
        %1188 = vmatpush1.msra.mxu0 0.0
        %1189 = vmatprep.subr.mxu0 0.0
        %1190 = vmatpush1.msra.mxu0 0.0
        %1191 = vmatprep.subr.mxu0 0.0
        %1192 = vmatpush1.msra.mxu0 0.0
        %1193 = vmatprep.subr.mxu0 0.0
        %1194 = vmatpush1.msra.mxu0 0.0
        %1195 = vmatprep.subr.mxu0 0.0
        %1196 = vmatpush1.msra.mxu0 0.0
        %1197 = vmatprep.subr.mxu0 0.0
        %1198 = vmatpush1.msra.mxu0 0.0
        %1199 = vmatprep.subr.mxu0 0.0
        %1200 = vmatpush1.msra.mxu0 0.0
        %1201 = vmatprep.subr.mxu0 0.0
        %1202 = vmatpush1.msra.mxu0 0.0
        %1203 = vmatprep.subr.mxu0 0.0
        %1204 = vmatpush1.msra.mxu0 0.0
        %1205 = vmatprep.subr.mxu0 0.0
        %1206 = vmatpush1.msra.mxu0 0.0
        %1207 = vmatprep.subr.mxu0 0.0
        %1208 = vmatpush1.msra.mxu0 0.0
        %1209 = vmatprep.subr.mxu0 0.0
        %1210 = vmatpush1.msra.mxu0 0.0
        %1211 = vmatprep.subr.mxu0 0.0
        %1212 = vmatpush1.msra.mxu0 0.0
        %1213 = vmatprep.subr.mxu0 0.0
        %1214 = vmatpush1.msra.mxu0 0.0
        %1215 = vmatprep.subr.mxu0 0.0
        %1216 = vmatpush1.msra.mxu0 0.0
        %1217 = vmatprep.subr.mxu0 0.0
        %1218 = vmatpush1.msra.mxu0 0.0
        %1219 = vmatprep.subr.mxu0 0.0
        %1220 = vmatpush1.msra.mxu0 0.0
        %1221 = vmatprep.subr.mxu0 0.0
        %1222 = vmatpush1.msra.mxu0 0.0
        %1223 = vmatprep.subr.mxu0 0.0
        %1224 = vmatpush1.msra.mxu0 0.0
        %1225 = vmatprep.subr.mxu0 0.0
        %1226 = vmatpush1.msra.mxu0 0.0
        %1227 = vmatprep.subr.mxu0 0.0
        %1228 = vmatpush1.msra.mxu0 0.0
        %1229 = vmatprep.subr.mxu0 0.0
        %1230 = vmatpush1.msra.mxu0 0.0
        %1231 = vmatprep.subr.mxu0 0.0
        %1232 = vmatpush1.msra.mxu0 0.0
        %1233 = vmatprep.subr.mxu0 0.0
        %1234 = vmatpush1.msra.mxu0 0.0
        %1235 = vmatprep.mubr.f32.mxu0 0.0
        %v1236 = vand.u32 %v156, 4294901760
        %1237 = vmatmul.mubr.f32.gmra.mrb[0].mxu0 %v1236
        %v1238 = vpop.f32.mrb[0].mxu0
        %v1239 = vadd.f32 %v1138, %v1238
        %v1240 = vpop.f32.mrb[0].mxu0
        %1241 = vmatprep.mubr.f32.mxu0 0.0
        %v1242 = vand.u32 %v159, 4294901760
        %1243 = vmatmul.mubr.f32.gmra.mrb[0].mxu0 %v1242
        %v1244 = vpop.f32.mrb[0].mxu0
        %v1245 = vadd.f32 %v1146, %v1244
        %v1246 = vpop.f32.mrb[0].mxu0
        %1247 = vmatprep.mubr.f32.mxu0 0.0
        %v1248 = vand.u32 %v162, 4294901760
        %1249 = vmatmul.mubr.f32.gmra.mrb[0].mxu0 %v1248
        %v1250 = vpop.f32.mrb[0].mxu0
        %v1251 = vadd.f32 %v1154, %v1250
        %v1252 = vpop.f32.mrb[0].mxu0
        %1253 = vmatprep.mubr.f32.mxu0 0.0
        %v1254 = vand.u32 %v165, 4294901760
        %1255 = vmatmul.mubr.f32.gmra.mrb[0].mxu0 %v1254
        %v1256 = vpop.f32.mrb[0].mxu0
        %v1257 = vadd.f32 %v1162, %v1256
        %v1258 = vpop.f32.mrb[0].mxu0
        %1259 = vdwg.mxu0
        %1260 = vmatprep.subr.mxu0 0.0
        %v1261 = vand.u32 %v761, 4294901760
        %1262 = vmatpush1.msra.mxu0 %v1261
        %1263 = vmatprep.subr.mxu0 0.0
        %v1264 = vand.u32 %v762, 4294901760
        %1265 = vmatpush1.msra.mxu0 %v1264
        %1266 = vmatprep.subr.mxu0 0.0
        %1267 = vmatpush1.msra.mxu0 0.0
        %1268 = vmatprep.subr.mxu0 0.0
        %1269 = vmatpush1.msra.mxu0 0.0
        %1270 = vmatprep.subr.mxu0 0.0
        %1271 = vmatpush1.msra.mxu0 0.0
        %1272 = vmatprep.subr.mxu0 0.0
        %1273 = vmatpush1.msra.mxu0 0.0
        %1274 = vmatprep.subr.mxu0 0.0
        %1275 = vmatpush1.msra.mxu0 0.0
        %1276 = vmatprep.subr.mxu0 0.0
        %1277 = vmatpush1.msra.mxu0 0.0
        %1278 = vmatprep.subr.mxu0 0.0
        %1279 = vmatpush1.msra.mxu0 0.0
        %1280 = vmatprep.subr.mxu0 0.0
        %1281 = vmatpush1.msra.mxu0 0.0
        %1282 = vmatprep.subr.mxu0 0.0
        %1283 = vmatpush1.msra.mxu0 0.0
        %1284 = vmatprep.subr.mxu0 0.0
        %1285 = vmatpush1.msra.mxu0 0.0
        %1286 = vmatprep.subr.mxu0 0.0
        %1287 = vmatpush1.msra.mxu0 0.0
        %1288 = vmatprep.subr.mxu0 0.0
        %1289 = vmatpush1.msra.mxu0 0.0
        %1290 = vmatprep.subr.mxu0 0.0
        %1291 = vmatpush1.msra.mxu0 0.0
        %1292 = vmatprep.subr.mxu0 0.0
        %1293 = vmatpush1.msra.mxu0 0.0
        %1294 = vmatprep.subr.mxu0 0.0
        %1295 = vmatpush1.msra.mxu0 0.0
        %1296 = vmatprep.subr.mxu0 0.0
        %1297 = vmatpush1.msra.mxu0 0.0
        %1298 = vmatprep.subr.mxu0 0.0
        %1299 = vmatpush1.msra.mxu0 0.0
        %1300 = vmatprep.subr.mxu0 0.0
        %1301 = vmatpush1.msra.mxu0 0.0
        %1302 = vmatprep.subr.mxu0 0.0
        %1303 = vmatpush1.msra.mxu0 0.0
        %1304 = vmatprep.subr.mxu0 0.0
        %1305 = vmatpush1.msra.mxu0 0.0
        %1306 = vmatprep.subr.mxu0 0.0
        %1307 = vmatpush1.msra.mxu0 0.0
        %1308 = vmatprep.subr.mxu0 0.0
        %1309 = vmatpush1.msra.mxu0 0.0
        %1310 = vmatprep.subr.mxu0 0.0
        %1311 = vmatpush1.msra.mxu0 0.0
        %1312 = vmatprep.subr.mxu0 0.0
        %1313 = vmatpush1.msra.mxu0 0.0
        %1314 = vmatprep.subr.mxu0 0.0
        %1315 = vmatpush1.msra.mxu0 0.0
        %1316 = vmatprep.subr.mxu0 0.0
        %1317 = vmatpush1.msra.mxu0 0.0
        %1318 = vmatprep.subr.mxu0 0.0
        %1319 = vmatpush1.msra.mxu0 0.0
        %1320 = vmatprep.subr.mxu0 0.0
        %1321 = vmatpush1.msra.mxu0 0.0
        %1322 = vmatprep.subr.mxu0 0.0
        %1323 = vmatpush1.msra.mxu0 0.0
        %1324 = vmatprep.subr.mxu0 0.0
        %1325 = vmatpush1.msra.mxu0 0.0
        %1326 = vmatprep.mubr.f32.mxu0 0.0
        %v1327 = vand.u32 %v156, 4294901760
        %1328 = vmatmul.mubr.f32.gmra.mrb[0].mxu0 %v1327
        %v1329 = vpop.f32.mrb[0].mxu0
        %v1330 = vadd.f32 %v1239, %v1329
        %v1331 = vpop.f32.mrb[0].mxu0
        %1332 = vmatprep.mubr.f32.mxu0 0.0
        %v1333 = vand.u32 %v159, 4294901760
        %1334 = vmatmul.mubr.f32.gmra.mrb[0].mxu0 %v1333
        %v1335 = vpop.f32.mrb[0].mxu0
        %v1336 = vadd.f32 %v1245, %v1335
        %v1337 = vpop.f32.mrb[0].mxu0
        %1338 = vmatprep.mubr.f32.mxu0 0.0
        %v1339 = vand.u32 %v162, 4294901760
        %1340 = vmatmul.mubr.f32.gmra.mrb[0].mxu0 %v1339
        %v1341 = vpop.f32.mrb[0].mxu0
        %v1342 = vadd.f32 %v1251, %v1341
        %v1343 = vpop.f32.mrb[0].mxu0
        %1344 = vmatprep.mubr.f32.mxu0 0.0
        %v1345 = vand.u32 %v165, 4294901760
        %1346 = vmatmul.mubr.f32.gmra.mrb[0].mxu0 %v1345
        %v1347 = vpop.f32.mrb[0].mxu0
        %v1348 = vadd.f32 %v1257, %v1347
        %v1349 = vpop.f32.mrb[0].mxu0
        %1350 = vdwg.mxu0
        %s1351 = scalar_lea.vmem %s137, 8 [#allocation2]
        %1352 = vst.msk [vmem:[%s1351] sm:$0xff] %vm755, %v1330
        %1353 = vst.msk [vmem:[%s1351 + $0x20] sm:$0xff] %vm755, %v1336
        %1354 = vst.msk [vmem:[%s1351 + $0x40] sm:$0xff] %vm755, %v1342
        %1355 = vst.msk [vmem:[%s1351 + $0x60] sm:$0xff] %vm755, %v1348
        %s1356 = scalar_lea.vmem %s142, 1
        %v1357 = vld [vmem:[%s1356] ss:$2 sm:$0xff]
        %s1358 = scalar_lea.vmem %s142, 17
        %v1359 = vld [vmem:[%s1358] ss:$2 sm:$0xff]
        %s1360 = scalar_lea.vmem %s142, 33
        %v1361 = vld [vmem:[%s1360] ss:$2 sm:$0xff]
        %s1362 = scalar_lea.vmem %s142, 49
        %v1363 = vld [vmem:[%s1362] ss:$2 sm:$0xff]
        %v1364 = vld [vmem:[%s1] sm:$0xff]
        %v1365 = vld [vmem:[%s1 + $0x8] sm:$0xff]
        %v1367 = vsel %vm154, %v1357, 0
        %v1370 = vsel %vm154, %v1359, 0
        %v1373 = vsel %vm154, %v1361, 0
        %v1376 = vsel %vm154, %v1363, 0
        %1378 = vmatprep.subr.mxu0 0.0
        %v1379 = vand.u32 %v1364, 4294901760
        %1380 = vmatpush1.msra.mxu0 %v1379
        %1381 = vmatprep.subr.mxu0 0.0
        %v1382 = vand.u32 %v1365, 4294901760
        %1383 = vmatpush1.msra.mxu0 %v1382
        %1384 = vmatprep.subr.mxu0 0.0
        %1385 = vmatpush1.msra.mxu0 0.0
        %1386 = vmatprep.subr.mxu0 0.0
        %1387 = vmatpush1.msra.mxu0 0.0
        %1388 = vmatprep.subr.mxu0 0.0
        %1389 = vmatpush1.msra.mxu0 0.0
        %1390 = vmatprep.subr.mxu0 0.0
        %1391 = vmatpush1.msra.mxu0 0.0
        %1392 = vmatprep.subr.mxu0 0.0
        %1393 = vmatpush1.msra.mxu0 0.0
        %1394 = vmatprep.subr.mxu0 0.0
        %1395 = vmatpush1.msra.mxu0 0.0
        %1396 = vmatprep.subr.mxu0 0.0
        %1397 = vmatpush1.msra.mxu0 0.0
        %1398 = vmatprep.subr.mxu0 0.0
        %1399 = vmatpush1.msra.mxu0 0.0
        %1400 = vmatprep.subr.mxu0 0.0
        %1401 = vmatpush1.msra.mxu0 0.0
        %1402 = vmatprep.subr.mxu0 0.0
        %1403 = vmatpush1.msra.mxu0 0.0
        %1404 = vmatprep.subr.mxu0 0.0
        %1405 = vmatpush1.msra.mxu0 0.0
        %1406 = vmatprep.subr.mxu0 0.0
        %1407 = vmatpush1.msra.mxu0 0.0
        %1408 = vmatprep.subr.mxu0 0.0
        %1409 = vmatpush1.msra.mxu0 0.0
        %1410 = vmatprep.subr.mxu0 0.0
        %1411 = vmatpush1.msra.mxu0 0.0
        %1412 = vmatprep.subr.mxu0 0.0
        %1413 = vmatpush1.msra.mxu0 0.0
        %1414 = vmatprep.subr.mxu0 0.0
        %1415 = vmatpush1.msra.mxu0 0.0
        %1416 = vmatprep.subr.mxu0 0.0
        %1417 = vmatpush1.msra.mxu0 0.0
        %1418 = vmatprep.subr.mxu0 0.0
        %1419 = vmatpush1.msra.mxu0 0.0
        %1420 = vmatprep.subr.mxu0 0.0
        %1421 = vmatpush1.msra.mxu0 0.0
        %1422 = vmatprep.subr.mxu0 0.0
        %1423 = vmatpush1.msra.mxu0 0.0
        %1424 = vmatprep.subr.mxu0 0.0
        %1425 = vmatpush1.msra.mxu0 0.0
        %1426 = vmatprep.subr.mxu0 0.0
        %1427 = vmatpush1.msra.mxu0 0.0
        %1428 = vmatprep.subr.mxu0 0.0
        %1429 = vmatpush1.msra.mxu0 0.0
        %1430 = vmatprep.subr.mxu0 0.0
        %1431 = vmatpush1.msra.mxu0 0.0
        %1432 = vmatprep.subr.mxu0 0.0
        %1433 = vmatpush1.msra.mxu0 0.0
        %1434 = vmatprep.subr.mxu0 0.0
        %1435 = vmatpush1.msra.mxu0 0.0
        %1436 = vmatprep.subr.mxu0 0.0
        %1437 = vmatpush1.msra.mxu0 0.0
        %1438 = vmatprep.subr.mxu0 0.0
        %1439 = vmatpush1.msra.mxu0 0.0
        %1440 = vmatprep.subr.mxu0 0.0
        %1441 = vmatpush1.msra.mxu0 0.0
        %1442 = vmatprep.subr.mxu0 0.0
        %1443 = vmatpush1.msra.mxu0 0.0
        %1444 = vmatprep.mubr.f32.mxu0 0.0
        %v1445 = vand.u32 %v1367, 4294901760
        %v1446 = vsub.f32 %v1367, %v1445
        %v1447 = vand.u32 %v1446, 4294901760
        %v1448 = vsub.f32 %v1446, %v1447
        %v1449 = vand.u32 %v1448, 4294901760
        %1450 = vmatmul.mubr.f32.gmra.mrb[0].mxu0 %v1449
        %v1451 = vpop.f32.mrb[0].mxu0
        %v1452 = vadd.f32 0.0, %v1451
        %v1453 = vpop.f32.mrb[0].mxu0
        %1454 = vmatprep.mubr.f32.mxu0 0.0
        %v1455 = vand.u32 %v1370, 4294901760
        %v1456 = vsub.f32 %v1370, %v1455
        %v1457 = vand.u32 %v1456, 4294901760
        %v1458 = vsub.f32 %v1456, %v1457
        %v1459 = vand.u32 %v1458, 4294901760
        %1460 = vmatmul.mubr.f32.gmra.mrb[0].mxu0 %v1459
        %v1461 = vpop.f32.mrb[0].mxu0
        %v1462 = vadd.f32 0.0, %v1461
        %v1463 = vpop.f32.mrb[0].mxu0
        %1464 = vmatprep.mubr.f32.mxu0 0.0
        %v1465 = vand.u32 %v1373, 4294901760
        %v1466 = vsub.f32 %v1373, %v1465
        %v1467 = vand.u32 %v1466, 4294901760
        %v1468 = vsub.f32 %v1466, %v1467
        %v1469 = vand.u32 %v1468, 4294901760
        %1470 = vmatmul.mubr.f32.gmra.mrb[0].mxu0 %v1469
        %v1471 = vpop.f32.mrb[0].mxu0
        %v1472 = vadd.f32 0.0, %v1471
        %v1473 = vpop.f32.mrb[0].mxu0
        %1474 = vmatprep.mubr.f32.mxu0 0.0
        %v1475 = vand.u32 %v1376, 4294901760
        %v1476 = vsub.f32 %v1376, %v1475
        %v1477 = vand.u32 %v1476, 4294901760
        %v1478 = vsub.f32 %v1476, %v1477
        %v1479 = vand.u32 %v1478, 4294901760
        %1480 = vmatmul.mubr.f32.gmra.mrb[0].mxu0 %v1479
        %v1481 = vpop.f32.mrb[0].mxu0
        %v1482 = vadd.f32 0.0, %v1481
        %v1483 = vpop.f32.mrb[0].mxu0
        %1484 = vdwg.mxu0
        %1485 = vmatprep.subr.mxu0 0.0
        %v1486 = vand.u32 %v1364, 4294901760
        %v1487 = vsub.f32 %v1364, %v1486
        %v1488 = vand.u32 %v1487, 4294901760
        %v1489 = vsub.f32 %v1487, %v1488
        %v1490 = vand.u32 %v1489, 4294901760
        %1491 = vmatpush1.msra.mxu0 %v1490
        %1492 = vmatprep.subr.mxu0 0.0
        %v1493 = vand.u32 %v1365, 4294901760
        %v1494 = vsub.f32 %v1365, %v1493
        %v1495 = vand.u32 %v1494, 4294901760
        %v1496 = vsub.f32 %v1494, %v1495
        %v1497 = vand.u32 %v1496, 4294901760
        %1498 = vmatpush1.msra.mxu0 %v1497
        %1499 = vmatprep.subr.mxu0 0.0
        %1500 = vmatpush1.msra.mxu0 0.0
        %1501 = vmatprep.subr.mxu0 0.0
        %1502 = vmatpush1.msra.mxu0 0.0
        %1503 = vmatprep.subr.mxu0 0.0
        %1504 = vmatpush1.msra.mxu0 0.0
        %1505 = vmatprep.subr.mxu0 0.0
        %1506 = vmatpush1.msra.mxu0 0.0
        %1507 = vmatprep.subr.mxu0 0.0
        %1508 = vmatpush1.msra.mxu0 0.0
        %1509 = vmatprep.subr.mxu0 0.0
        %1510 = vmatpush1.msra.mxu0 0.0
        %1511 = vmatprep.subr.mxu0 0.0
        %1512 = vmatpush1.msra.mxu0 0.0
        %1513 = vmatprep.subr.mxu0 0.0
        %1514 = vmatpush1.msra.mxu0 0.0
        %1515 = vmatprep.subr.mxu0 0.0
        %1516 = vmatpush1.msra.mxu0 0.0
        %1517 = vmatprep.subr.mxu0 0.0
        %1518 = vmatpush1.msra.mxu0 0.0
        %1519 = vmatprep.subr.mxu0 0.0
        %1520 = vmatpush1.msra.mxu0 0.0
        %1521 = vmatprep.subr.mxu0 0.0
        %1522 = vmatpush1.msra.mxu0 0.0
        %1523 = vmatprep.subr.mxu0 0.0
        %1524 = vmatpush1.msra.mxu0 0.0
        %1525 = vmatprep.subr.mxu0 0.0
        %1526 = vmatpush1.msra.mxu0 0.0
        %1527 = vmatprep.subr.mxu0 0.0
        %1528 = vmatpush1.msra.mxu0 0.0
        %1529 = vmatprep.subr.mxu0 0.0
        %1530 = vmatpush1.msra.mxu0 0.0
        %1531 = vmatprep.subr.mxu0 0.0
        %1532 = vmatpush1.msra.mxu0 0.0
        %1533 = vmatprep.subr.mxu0 0.0
        %1534 = vmatpush1.msra.mxu0 0.0
        %1535 = vmatprep.subr.mxu0 0.0
        %1536 = vmatpush1.msra.mxu0 0.0
        %1537 = vmatprep.subr.mxu0 0.0
        %1538 = vmatpush1.msra.mxu0 0.0
        %1539 = vmatprep.subr.mxu0 0.0
        %1540 = vmatpush1.msra.mxu0 0.0
        %1541 = vmatprep.subr.mxu0 0.0
        %1542 = vmatpush1.msra.mxu0 0.0
        %1543 = vmatprep.subr.mxu0 0.0
        %1544 = vmatpush1.msra.mxu0 0.0
        %1545 = vmatprep.subr.mxu0 0.0
        %1546 = vmatpush1.msra.mxu0 0.0
        %1547 = vmatprep.subr.mxu0 0.0
        %1548 = vmatpush1.msra.mxu0 0.0
        %1549 = vmatprep.subr.mxu0 0.0
        %1550 = vmatpush1.msra.mxu0 0.0
        %1551 = vmatprep.subr.mxu0 0.0
        %1552 = vmatpush1.msra.mxu0 0.0
        %1553 = vmatprep.subr.mxu0 0.0
        %1554 = vmatpush1.msra.mxu0 0.0
        %1555 = vmatprep.subr.mxu0 0.0
        %1556 = vmatpush1.msra.mxu0 0.0
        %1557 = vmatprep.subr.mxu0 0.0
        %1558 = vmatpush1.msra.mxu0 0.0
        %1559 = vmatprep.mubr.f32.mxu0 0.0
        %v1560 = vand.u32 %v1367, 4294901760
        %1561 = vmatmul.mubr.f32.gmra.mrb[0].mxu0 %v1560
        %v1562 = vpop.f32.mrb[0].mxu0
        %v1563 = vadd.f32 %v1452, %v1562
        %v1564 = vpop.f32.mrb[0].mxu0
        %1565 = vmatprep.mubr.f32.mxu0 0.0
        %v1566 = vand.u32 %v1370, 4294901760
        %1567 = vmatmul.mubr.f32.gmra.mrb[0].mxu0 %v1566
        %v1568 = vpop.f32.mrb[0].mxu0
        %v1569 = vadd.f32 %v1462, %v1568
        %v1570 = vpop.f32.mrb[0].mxu0
        %1571 = vmatprep.mubr.f32.mxu0 0.0
        %v1572 = vand.u32 %v1373, 4294901760
        %1573 = vmatmul.mubr.f32.gmra.mrb[0].mxu0 %v1572
        %v1574 = vpop.f32.mrb[0].mxu0
        %v1575 = vadd.f32 %v1472, %v1574
        %v1576 = vpop.f32.mrb[0].mxu0
        %1577 = vmatprep.mubr.f32.mxu0 0.0
        %v1578 = vand.u32 %v1376, 4294901760
        %1579 = vmatmul.mubr.f32.gmra.mrb[0].mxu0 %v1578
        %v1580 = vpop.f32.mrb[0].mxu0
        %v1581 = vadd.f32 %v1482, %v1580
        %v1582 = vpop.f32.mrb[0].mxu0
        %1583 = vdwg.mxu0
        %1584 = vmatprep.subr.mxu0 0.0
        %v1585 = vand.u32 %v1364, 4294901760
        %v1586 = vsub.f32 %v1364, %v1585
        %1587 = vmatpush1.msra.mxu0 %v1586
        %1588 = vmatprep.subr.mxu0 0.0
        %v1589 = vand.u32 %v1365, 4294901760
        %v1590 = vsub.f32 %v1365, %v1589
        %1591 = vmatpush1.msra.mxu0 %v1590
        %1592 = vmatprep.subr.mxu0 0.0
        %1593 = vmatpush1.msra.mxu0 0.0
        %1594 = vmatprep.subr.mxu0 0.0
        %1595 = vmatpush1.msra.mxu0 0.0
        %1596 = vmatprep.subr.mxu0 0.0
        %1597 = vmatpush1.msra.mxu0 0.0
        %1598 = vmatprep.subr.mxu0 0.0
        %1599 = vmatpush1.msra.mxu0 0.0
        %1600 = vmatprep.subr.mxu0 0.0
        %1601 = vmatpush1.msra.mxu0 0.0
        %1602 = vmatprep.subr.mxu0 0.0
        %1603 = vmatpush1.msra.mxu0 0.0
        %1604 = vmatprep.subr.mxu0 0.0
        %1605 = vmatpush1.msra.mxu0 0.0
        %1606 = vmatprep.subr.mxu0 0.0
        %1607 = vmatpush1.msra.mxu0 0.0
        %1608 = vmatprep.subr.mxu0 0.0
        %1609 = vmatpush1.msra.mxu0 0.0
        %1610 = vmatprep.subr.mxu0 0.0
        %1611 = vmatpush1.msra.mxu0 0.0
        %1612 = vmatprep.subr.mxu0 0.0
        %1613 = vmatpush1.msra.mxu0 0.0
        %1614 = vmatprep.subr.mxu0 0.0
        %1615 = vmatpush1.msra.mxu0 0.0
        %1616 = vmatprep.subr.mxu0 0.0
        %1617 = vmatpush1.msra.mxu0 0.0
        %1618 = vmatprep.subr.mxu0 0.0
        %1619 = vmatpush1.msra.mxu0 0.0
        %1620 = vmatprep.subr.mxu0 0.0
        %1621 = vmatpush1.msra.mxu0 0.0
        %1622 = vmatprep.subr.mxu0 0.0
        %1623 = vmatpush1.msra.mxu0 0.0
        %1624 = vmatprep.subr.mxu0 0.0
        %1625 = vmatpush1.msra.mxu0 0.0
        %1626 = vmatprep.subr.mxu0 0.0
        %1627 = vmatpush1.msra.mxu0 0.0
        %1628 = vmatprep.subr.mxu0 0.0
        %1629 = vmatpush1.msra.mxu0 0.0
        %1630 = vmatprep.subr.mxu0 0.0
        %1631 = vmatpush1.msra.mxu0 0.0
        %1632 = vmatprep.subr.mxu0 0.0
        %1633 = vmatpush1.msra.mxu0 0.0
        %1634 = vmatprep.subr.mxu0 0.0
        %1635 = vmatpush1.msra.mxu0 0.0
        %1636 = vmatprep.subr.mxu0 0.0
        %1637 = vmatpush1.msra.mxu0 0.0
        %1638 = vmatprep.subr.mxu0 0.0
        %1639 = vmatpush1.msra.mxu0 0.0
        %1640 = vmatprep.subr.mxu0 0.0
        %1641 = vmatpush1.msra.mxu0 0.0
        %1642 = vmatprep.subr.mxu0 0.0
        %1643 = vmatpush1.msra.mxu0 0.0
        %1644 = vmatprep.subr.mxu0 0.0
        %1645 = vmatpush1.msra.mxu0 0.0
        %1646 = vmatprep.subr.mxu0 0.0
        %1647 = vmatpush1.msra.mxu0 0.0
        %1648 = vmatprep.subr.mxu0 0.0
        %1649 = vmatpush1.msra.mxu0 0.0
        %1650 = vmatprep.subr.mxu0 0.0
        %1651 = vmatpush1.msra.mxu0 0.0
        %1652 = vmatprep.mubr.f32.mxu0 0.0
        %v1653 = vand.u32 %v1367, 4294901760
        %v1654 = vsub.f32 %v1367, %v1653
        %1655 = vmatmul.mubr.f32.gmra.mrb[0].mxu0 %v1654
        %v1656 = vpop.f32.mrb[0].mxu0
        %v1657 = vadd.f32 %v1563, %v1656
        %v1658 = vpop.f32.mrb[0].mxu0
        %1659 = vmatprep.mubr.f32.mxu0 0.0
        %v1660 = vand.u32 %v1370, 4294901760
        %v1661 = vsub.f32 %v1370, %v1660
        %1662 = vmatmul.mubr.f32.gmra.mrb[0].mxu0 %v1661
        %v1663 = vpop.f32.mrb[0].mxu0
        %v1664 = vadd.f32 %v1569, %v1663
        %v1665 = vpop.f32.mrb[0].mxu0
        %1666 = vmatprep.mubr.f32.mxu0 0.0
        %v1667 = vand.u32 %v1373, 4294901760
        %v1668 = vsub.f32 %v1373, %v1667
        %1669 = vmatmul.mubr.f32.gmra.mrb[0].mxu0 %v1668
        %v1670 = vpop.f32.mrb[0].mxu0
        %v1671 = vadd.f32 %v1575, %v1670
        %v1672 = vpop.f32.mrb[0].mxu0
        %1673 = vmatprep.mubr.f32.mxu0 0.0
        %v1674 = vand.u32 %v1376, 4294901760
        %v1675 = vsub.f32 %v1376, %v1674
        %1676 = vmatmul.mubr.f32.gmra.mrb[0].mxu0 %v1675
        %v1677 = vpop.f32.mrb[0].mxu0
        %v1678 = vadd.f32 %v1581, %v1677
        %v1679 = vpop.f32.mrb[0].mxu0
        %1680 = vdwg.mxu0
        %1681 = vmatprep.subr.mxu0 0.0
        %v1682 = vand.u32 %v1364, 4294901760
        %1683 = vmatpush1.msra.mxu0 %v1682
        %1684 = vmatprep.subr.mxu0 0.0
        %v1685 = vand.u32 %v1365, 4294901760
        %1686 = vmatpush1.msra.mxu0 %v1685
        %1687 = vmatprep.subr.mxu0 0.0
        %1688 = vmatpush1.msra.mxu0 0.0
        %1689 = vmatprep.subr.mxu0 0.0
        %1690 = vmatpush1.msra.mxu0 0.0
        %1691 = vmatprep.subr.mxu0 0.0
        %1692 = vmatpush1.msra.mxu0 0.0
        %1693 = vmatprep.subr.mxu0 0.0
        %1694 = vmatpush1.msra.mxu0 0.0
        %1695 = vmatprep.subr.mxu0 0.0
        %1696 = vmatpush1.msra.mxu0 0.0
        %1697 = vmatprep.subr.mxu0 0.0
        %1698 = vmatpush1.msra.mxu0 0.0
        %1699 = vmatprep.subr.mxu0 0.0
        %1700 = vmatpush1.msra.mxu0 0.0
        %1701 = vmatprep.subr.mxu0 0.0
        %1702 = vmatpush1.msra.mxu0 0.0
        %1703 = vmatprep.subr.mxu0 0.0
        %1704 = vmatpush1.msra.mxu0 0.0
        %1705 = vmatprep.subr.mxu0 0.0
        %1706 = vmatpush1.msra.mxu0 0.0
        %1707 = vmatprep.subr.mxu0 0.0
        %1708 = vmatpush1.msra.mxu0 0.0
        %1709 = vmatprep.subr.mxu0 0.0
        %1710 = vmatpush1.msra.mxu0 0.0
        %1711 = vmatprep.subr.mxu0 0.0
        %1712 = vmatpush1.msra.mxu0 0.0
        %1713 = vmatprep.subr.mxu0 0.0
        %1714 = vmatpush1.msra.mxu0 0.0
        %1715 = vmatprep.subr.mxu0 0.0
        %1716 = vmatpush1.msra.mxu0 0.0
        %1717 = vmatprep.subr.mxu0 0.0
        %1718 = vmatpush1.msra.mxu0 0.0
        %1719 = vmatprep.subr.mxu0 0.0
        %1720 = vmatpush1.msra.mxu0 0.0
        %1721 = vmatprep.subr.mxu0 0.0
        %1722 = vmatpush1.msra.mxu0 0.0
        %1723 = vmatprep.subr.mxu0 0.0
        %1724 = vmatpush1.msra.mxu0 0.0
        %1725 = vmatprep.subr.mxu0 0.0
        %1726 = vmatpush1.msra.mxu0 0.0
        %1727 = vmatprep.subr.mxu0 0.0
        %1728 = vmatpush1.msra.mxu0 0.0
        %1729 = vmatprep.subr.mxu0 0.0
        %1730 = vmatpush1.msra.mxu0 0.0
        %1731 = vmatprep.subr.mxu0 0.0
        %1732 = vmatpush1.msra.mxu0 0.0
        %1733 = vmatprep.subr.mxu0 0.0
        %1734 = vmatpush1.msra.mxu0 0.0
        %1735 = vmatprep.subr.mxu0 0.0
        %1736 = vmatpush1.msra.mxu0 0.0
        %1737 = vmatprep.subr.mxu0 0.0
        %1738 = vmatpush1.msra.mxu0 0.0
        %1739 = vmatprep.subr.mxu0 0.0
        %1740 = vmatpush1.msra.mxu0 0.0
        %1741 = vmatprep.subr.mxu0 0.0
        %1742 = vmatpush1.msra.mxu0 0.0
        %1743 = vmatprep.subr.mxu0 0.0
        %1744 = vmatpush1.msra.mxu0 0.0
        %1745 = vmatprep.subr.mxu0 0.0
        %1746 = vmatpush1.msra.mxu0 0.0
        %1747 = vmatprep.mubr.f32.mxu0 0.0
        %v1748 = vand.u32 %v1367, 4294901760
        %v1749 = vsub.f32 %v1367, %v1748
        %v1750 = vand.u32 %v1749, 4294901760
        %1751 = vmatmul.mubr.f32.gmra.mrb[0].mxu0 %v1750
        %v1752 = vpop.f32.mrb[0].mxu0
        %v1753 = vadd.f32 %v1657, %v1752
        %v1754 = vpop.f32.mrb[0].mxu0
        %1755 = vmatprep.mubr.f32.mxu0 0.0
        %v1756 = vand.u32 %v1370, 4294901760
        %v1757 = vsub.f32 %v1370, %v1756
        %v1758 = vand.u32 %v1757, 4294901760
        %1759 = vmatmul.mubr.f32.gmra.mrb[0].mxu0 %v1758
        %v1760 = vpop.f32.mrb[0].mxu0
        %v1761 = vadd.f32 %v1664, %v1760
        %v1762 = vpop.f32.mrb[0].mxu0
        %1763 = vmatprep.mubr.f32.mxu0 0.0
        %v1764 = vand.u32 %v1373, 4294901760
        %v1765 = vsub.f32 %v1373, %v1764
        %v1766 = vand.u32 %v1765, 4294901760
        %1767 = vmatmul.mubr.f32.gmra.mrb[0].mxu0 %v1766
        %v1768 = vpop.f32.mrb[0].mxu0
        %v1769 = vadd.f32 %v1671, %v1768
        %v1770 = vpop.f32.mrb[0].mxu0
        %1771 = vmatprep.mubr.f32.mxu0 0.0
        %v1772 = vand.u32 %v1376, 4294901760
        %v1773 = vsub.f32 %v1376, %v1772
        %v1774 = vand.u32 %v1773, 4294901760
        %1775 = vmatmul.mubr.f32.gmra.mrb[0].mxu0 %v1774
        %v1776 = vpop.f32.mrb[0].mxu0
        %v1777 = vadd.f32 %v1678, %v1776
        %v1778 = vpop.f32.mrb[0].mxu0
        %1779 = vdwg.mxu0
        %1780 = vmatprep.subr.mxu0 0.0
        %v1781 = vand.u32 %v1364, 4294901760
        %v1782 = vsub.f32 %v1364, %v1781
        %v1783 = vand.u32 %v1782, 4294901760
        %1784 = vmatpush1.msra.mxu0 %v1783
        %1785 = vmatprep.subr.mxu0 0.0
        %v1786 = vand.u32 %v1365, 4294901760
        %v1787 = vsub.f32 %v1365, %v1786
        %v1788 = vand.u32 %v1787, 4294901760
        %1789 = vmatpush1.msra.mxu0 %v1788
        %1790 = vmatprep.subr.mxu0 0.0
        %1791 = vmatpush1.msra.mxu0 0.0
        %1792 = vmatprep.subr.mxu0 0.0
        %1793 = vmatpush1.msra.mxu0 0.0
        %1794 = vmatprep.subr.mxu0 0.0
        %1795 = vmatpush1.msra.mxu0 0.0
        %1796 = vmatprep.subr.mxu0 0.0
        %1797 = vmatpush1.msra.mxu0 0.0
        %1798 = vmatprep.subr.mxu0 0.0
        %1799 = vmatpush1.msra.mxu0 0.0
        %1800 = vmatprep.subr.mxu0 0.0
        %1801 = vmatpush1.msra.mxu0 0.0
        %1802 = vmatprep.subr.mxu0 0.0
        %1803 = vmatpush1.msra.mxu0 0.0
        %1804 = vmatprep.subr.mxu0 0.0
        %1805 = vmatpush1.msra.mxu0 0.0
        %1806 = vmatprep.subr.mxu0 0.0
        %1807 = vmatpush1.msra.mxu0 0.0
        %1808 = vmatprep.subr.mxu0 0.0
        %1809 = vmatpush1.msra.mxu0 0.0
        %1810 = vmatprep.subr.mxu0 0.0
        %1811 = vmatpush1.msra.mxu0 0.0
        %1812 = vmatprep.subr.mxu0 0.0
        %1813 = vmatpush1.msra.mxu0 0.0
        %1814 = vmatprep.subr.mxu0 0.0
        %1815 = vmatpush1.msra.mxu0 0.0
        %1816 = vmatprep.subr.mxu0 0.0
        %1817 = vmatpush1.msra.mxu0 0.0
        %1818 = vmatprep.subr.mxu0 0.0
        %1819 = vmatpush1.msra.mxu0 0.0
        %1820 = vmatprep.subr.mxu0 0.0
        %1821 = vmatpush1.msra.mxu0 0.0
        %1822 = vmatprep.subr.mxu0 0.0
        %1823 = vmatpush1.msra.mxu0 0.0
        %1824 = vmatprep.subr.mxu0 0.0
        %1825 = vmatpush1.msra.mxu0 0.0
        %1826 = vmatprep.subr.mxu0 0.0
        %1827 = vmatpush1.msra.mxu0 0.0
        %1828 = vmatprep.subr.mxu0 0.0
        %1829 = vmatpush1.msra.mxu0 0.0
        %1830 = vmatprep.subr.mxu0 0.0
        %1831 = vmatpush1.msra.mxu0 0.0
        %1832 = vmatprep.subr.mxu0 0.0
        %1833 = vmatpush1.msra.mxu0 0.0
        %1834 = vmatprep.subr.mxu0 0.0
        %1835 = vmatpush1.msra.mxu0 0.0
        %1836 = vmatprep.subr.mxu0 0.0
        %1837 = vmatpush1.msra.mxu0 0.0
        %1838 = vmatprep.subr.mxu0 0.0
        %1839 = vmatpush1.msra.mxu0 0.0
        %1840 = vmatprep.subr.mxu0 0.0
        %1841 = vmatpush1.msra.mxu0 0.0
        %1842 = vmatprep.subr.mxu0 0.0
        %1843 = vmatpush1.msra.mxu0 0.0
        %1844 = vmatprep.subr.mxu0 0.0
        %1845 = vmatpush1.msra.mxu0 0.0
        %1846 = vmatprep.subr.mxu0 0.0
        %1847 = vmatpush1.msra.mxu0 0.0
        %1848 = vmatprep.subr.mxu0 0.0
        %1849 = vmatpush1.msra.mxu0 0.0
        %1850 = vmatprep.mubr.f32.mxu0 0.0
        %v1851 = vand.u32 %v1367, 4294901760
        %1852 = vmatmul.mubr.f32.gmra.mrb[0].mxu0 %v1851
        %v1853 = vpop.f32.mrb[0].mxu0
        %v1854 = vadd.f32 %v1753, %v1853
        %v1855 = vpop.f32.mrb[0].mxu0
        %1856 = vmatprep.mubr.f32.mxu0 0.0
        %v1857 = vand.u32 %v1370, 4294901760
        %1858 = vmatmul.mubr.f32.gmra.mrb[0].mxu0 %v1857
        %v1859 = vpop.f32.mrb[0].mxu0
        %v1860 = vadd.f32 %v1761, %v1859
        %v1861 = vpop.f32.mrb[0].mxu0
        %1862 = vmatprep.mubr.f32.mxu0 0.0
        %v1863 = vand.u32 %v1373, 4294901760
        %1864 = vmatmul.mubr.f32.gmra.mrb[0].mxu0 %v1863
        %v1865 = vpop.f32.mrb[0].mxu0
        %v1866 = vadd.f32 %v1769, %v1865
        %v1867 = vpop.f32.mrb[0].mxu0
        %1868 = vmatprep.mubr.f32.mxu0 0.0
        %v1869 = vand.u32 %v1376, 4294901760
        %1870 = vmatmul.mubr.f32.gmra.mrb[0].mxu0 %v1869
        %v1871 = vpop.f32.mrb[0].mxu0
        %v1872 = vadd.f32 %v1777, %v1871
        %v1873 = vpop.f32.mrb[0].mxu0
        %1874 = vdwg.mxu0
        %1875 = vmatprep.subr.mxu0 0.0
        %v1876 = vand.u32 %v1364, 4294901760
        %1877 = vmatpush1.msra.mxu0 %v1876
        %1878 = vmatprep.subr.mxu0 0.0
        %v1879 = vand.u32 %v1365, 4294901760
        %1880 = vmatpush1.msra.mxu0 %v1879
        %1881 = vmatprep.subr.mxu0 0.0
        %1882 = vmatpush1.msra.mxu0 0.0
        %1883 = vmatprep.subr.mxu0 0.0
        %1884 = vmatpush1.msra.mxu0 0.0
        %1885 = vmatprep.subr.mxu0 0.0
        %1886 = vmatpush1.msra.mxu0 0.0
        %1887 = vmatprep.subr.mxu0 0.0
        %1888 = vmatpush1.msra.mxu0 0.0
        %1889 = vmatprep.subr.mxu0 0.0
        %1890 = vmatpush1.msra.mxu0 0.0
        %1891 = vmatprep.subr.mxu0 0.0
        %1892 = vmatpush1.msra.mxu0 0.0
        %1893 = vmatprep.subr.mxu0 0.0
        %1894 = vmatpush1.msra.mxu0 0.0
        %1895 = vmatprep.subr.mxu0 0.0
        %1896 = vmatpush1.msra.mxu0 0.0
        %1897 = vmatprep.subr.mxu0 0.0
        %1898 = vmatpush1.msra.mxu0 0.0
        %1899 = vmatprep.subr.mxu0 0.0
        %1900 = vmatpush1.msra.mxu0 0.0
        %1901 = vmatprep.subr.mxu0 0.0
        %1902 = vmatpush1.msra.mxu0 0.0
        %1903 = vmatprep.subr.mxu0 0.0
        %1904 = vmatpush1.msra.mxu0 0.0
        %1905 = vmatprep.subr.mxu0 0.0
        %1906 = vmatpush1.msra.mxu0 0.0
        %1907 = vmatprep.subr.mxu0 0.0
        %1908 = vmatpush1.msra.mxu0 0.0
        %1909 = vmatprep.subr.mxu0 0.0
        %1910 = vmatpush1.msra.mxu0 0.0
        %1911 = vmatprep.subr.mxu0 0.0
        %1912 = vmatpush1.msra.mxu0 0.0
        %1913 = vmatprep.subr.mxu0 0.0
        %1914 = vmatpush1.msra.mxu0 0.0
        %1915 = vmatprep.subr.mxu0 0.0
        %1916 = vmatpush1.msra.mxu0 0.0
        %1917 = vmatprep.subr.mxu0 0.0
        %1918 = vmatpush1.msra.mxu0 0.0
        %1919 = vmatprep.subr.mxu0 0.0
        %1920 = vmatpush1.msra.mxu0 0.0
        %1921 = vmatprep.subr.mxu0 0.0
        %1922 = vmatpush1.msra.mxu0 0.0
        %1923 = vmatprep.subr.mxu0 0.0
        %1924 = vmatpush1.msra.mxu0 0.0
        %1925 = vmatprep.subr.mxu0 0.0
        %1926 = vmatpush1.msra.mxu0 0.0
        %1927 = vmatprep.subr.mxu0 0.0
        %1928 = vmatpush1.msra.mxu0 0.0
        %1929 = vmatprep.subr.mxu0 0.0
        %1930 = vmatpush1.msra.mxu0 0.0
        %1931 = vmatprep.subr.mxu0 0.0
        %1932 = vmatpush1.msra.mxu0 0.0
        %1933 = vmatprep.subr.mxu0 0.0
        %1934 = vmatpush1.msra.mxu0 0.0
        %1935 = vmatprep.subr.mxu0 0.0
        %1936 = vmatpush1.msra.mxu0 0.0
        %1937 = vmatprep.subr.mxu0 0.0
        %1938 = vmatpush1.msra.mxu0 0.0
        %1939 = vmatprep.subr.mxu0 0.0
        %1940 = vmatpush1.msra.mxu0 0.0
        %1941 = vmatprep.mubr.f32.mxu0 0.0
        %v1942 = vand.u32 %v1367, 4294901760
        %1943 = vmatmul.mubr.f32.gmra.mrb[0].mxu0 %v1942
        %v1944 = vpop.f32.mrb[0].mxu0
        %v1945 = vadd.f32 %v1854, %v1944
        %v1946 = vpop.f32.mrb[0].mxu0
        %1947 = vmatprep.mubr.f32.mxu0 0.0
        %v1948 = vand.u32 %v1370, 4294901760
        %1949 = vmatmul.mubr.f32.gmra.mrb[0].mxu0 %v1948
        %v1950 = vpop.f32.mrb[0].mxu0
        %v1951 = vadd.f32 %v1860, %v1950
        %v1952 = vpop.f32.mrb[0].mxu0
        %1953 = vmatprep.mubr.f32.mxu0 0.0
        %v1954 = vand.u32 %v1373, 4294901760
        %1955 = vmatmul.mubr.f32.gmra.mrb[0].mxu0 %v1954
        %v1956 = vpop.f32.mrb[0].mxu0
        %v1957 = vadd.f32 %v1866, %v1956
        %v1958 = vpop.f32.mrb[0].mxu0
        %1959 = vmatprep.mubr.f32.mxu0 0.0
        %v1960 = vand.u32 %v1376, 4294901760
        %1961 = vmatmul.mubr.f32.gmra.mrb[0].mxu0 %v1960
        %v1962 = vpop.f32.mrb[0].mxu0
        %v1963 = vadd.f32 %v1872, %v1962
        %v1964 = vpop.f32.mrb[0].mxu0
        %1965 = vdwg.mxu0
        %s1966 = scalar_lea.vmem %s137, 16 [#allocation2]
        %1967 = vst.msk [vmem:[%s1966] sm:$0xff] %vm755, %v1945
        %1968 = vst.msk [vmem:[%s1966 + $0x20] sm:$0xff] %vm755, %v1951
        %1969 = vst.msk [vmem:[%s1966 + $0x40] sm:$0xff] %vm755, %v1957
        %1970 = vst.msk [vmem:[%s1966 + $0x60] sm:$0xff] %vm755, %v1963
        %v1971 = vld [vmem:[%s760] sm:$0xff]
        %v1972 = vld [vmem:[%s760 + $0x8] sm:$0xff]
        %1973 = vmatprep.subr.mxu0 0.0
        %v1974 = vand.u32 %v1971, 4294901760
        %1975 = vmatpush1.msra.mxu0 %v1974
        %1976 = vmatprep.subr.mxu0 0.0
        %v1977 = vand.u32 %v1972, 4294901760
        %1978 = vmatpush1.msra.mxu0 %v1977
        %1979 = vmatprep.subr.mxu0 0.0
        %1980 = vmatpush1.msra.mxu0 0.0
        %1981 = vmatprep.subr.mxu0 0.0
        %1982 = vmatpush1.msra.mxu0 0.0
        %1983 = vmatprep.subr.mxu0 0.0
        %1984 = vmatpush1.msra.mxu0 0.0
        %1985 = vmatprep.subr.mxu0 0.0
        %1986 = vmatpush1.msra.mxu0 0.0
        %1987 = vmatprep.subr.mxu0 0.0
        %1988 = vmatpush1.msra.mxu0 0.0
        %1989 = vmatprep.subr.mxu0 0.0
        %1990 = vmatpush1.msra.mxu0 0.0
        %1991 = vmatprep.subr.mxu0 0.0
        %1992 = vmatpush1.msra.mxu0 0.0
        %1993 = vmatprep.subr.mxu0 0.0
        %1994 = vmatpush1.msra.mxu0 0.0
        %1995 = vmatprep.subr.mxu0 0.0
        %1996 = vmatpush1.msra.mxu0 0.0
        %1997 = vmatprep.subr.mxu0 0.0
        %1998 = vmatpush1.msra.mxu0 0.0
        %1999 = vmatprep.subr.mxu0 0.0
        %2000 = vmatpush1.msra.mxu0 0.0
        %2001 = vmatprep.subr.mxu0 0.0
        %2002 = vmatpush1.msra.mxu0 0.0
        %2003 = vmatprep.subr.mxu0 0.0
        %2004 = vmatpush1.msra.mxu0 0.0
        %2005 = vmatprep.subr.mxu0 0.0
        %2006 = vmatpush1.msra.mxu0 0.0
        %2007 = vmatprep.subr.mxu0 0.0
        %2008 = vmatpush1.msra.mxu0 0.0
        %2009 = vmatprep.subr.mxu0 0.0
        %2010 = vmatpush1.msra.mxu0 0.0
        %2011 = vmatprep.subr.mxu0 0.0
        %2012 = vmatpush1.msra.mxu0 0.0
        %2013 = vmatprep.subr.mxu0 0.0
        %2014 = vmatpush1.msra.mxu0 0.0
        %2015 = vmatprep.subr.mxu0 0.0
        %2016 = vmatpush1.msra.mxu0 0.0
        %2017 = vmatprep.subr.mxu0 0.0
        %2018 = vmatpush1.msra.mxu0 0.0
        %2019 = vmatprep.subr.mxu0 0.0
        %2020 = vmatpush1.msra.mxu0 0.0
        %2021 = vmatprep.subr.mxu0 0.0
        %2022 = vmatpush1.msra.mxu0 0.0
        %2023 = vmatprep.subr.mxu0 0.0
        %2024 = vmatpush1.msra.mxu0 0.0
        %2025 = vmatprep.subr.mxu0 0.0
        %2026 = vmatpush1.msra.mxu0 0.0
        %2027 = vmatprep.subr.mxu0 0.0
        %2028 = vmatpush1.msra.mxu0 0.0
        %2029 = vmatprep.subr.mxu0 0.0
        %2030 = vmatpush1.msra.mxu0 0.0
        %2031 = vmatprep.subr.mxu0 0.0
        %2032 = vmatpush1.msra.mxu0 0.0
        %2033 = vmatprep.subr.mxu0 0.0
        %2034 = vmatpush1.msra.mxu0 0.0
        %2035 = vmatprep.subr.mxu0 0.0
        %2036 = vmatpush1.msra.mxu0 0.0
        %2037 = vmatprep.subr.mxu0 0.0
        %2038 = vmatpush1.msra.mxu0 0.0
        %2039 = vmatprep.mubr.f32.mxu0 0.0
        %v2040 = vand.u32 %v1367, 4294901760
        %v2041 = vsub.f32 %v1367, %v2040
        %v2042 = vand.u32 %v2041, 4294901760
        %v2043 = vsub.f32 %v2041, %v2042
        %v2044 = vand.u32 %v2043, 4294901760
        %2045 = vmatmul.mubr.f32.gmra.mrb[0].mxu0 %v2044
        %v2046 = vpop.f32.mrb[0].mxu0
        %v2047 = vadd.f32 0.0, %v2046
        %v2048 = vpop.f32.mrb[0].mxu0
        %2049 = vmatprep.mubr.f32.mxu0 0.0
        %v2050 = vand.u32 %v1370, 4294901760
        %v2051 = vsub.f32 %v1370, %v2050
        %v2052 = vand.u32 %v2051, 4294901760
        %v2053 = vsub.f32 %v2051, %v2052
        %v2054 = vand.u32 %v2053, 4294901760
        %2055 = vmatmul.mubr.f32.gmra.mrb[0].mxu0 %v2054
        %v2056 = vpop.f32.mrb[0].mxu0
        %v2057 = vadd.f32 0.0, %v2056
        %v2058 = vpop.f32.mrb[0].mxu0
        %2059 = vmatprep.mubr.f32.mxu0 0.0
        %v2060 = vand.u32 %v1373, 4294901760
        %v2061 = vsub.f32 %v1373, %v2060
        %v2062 = vand.u32 %v2061, 4294901760
        %v2063 = vsub.f32 %v2061, %v2062
        %v2064 = vand.u32 %v2063, 4294901760
        %2065 = vmatmul.mubr.f32.gmra.mrb[0].mxu0 %v2064
        %v2066 = vpop.f32.mrb[0].mxu0
        %v2067 = vadd.f32 0.0, %v2066
        %v2068 = vpop.f32.mrb[0].mxu0
        %2069 = vmatprep.mubr.f32.mxu0 0.0
        %v2070 = vand.u32 %v1376, 4294901760
        %v2071 = vsub.f32 %v1376, %v2070
        %v2072 = vand.u32 %v2071, 4294901760
        %v2073 = vsub.f32 %v2071, %v2072
        %v2074 = vand.u32 %v2073, 4294901760
        %2075 = vmatmul.mubr.f32.gmra.mrb[0].mxu0 %v2074
        %v2076 = vpop.f32.mrb[0].mxu0
        %v2077 = vadd.f32 0.0, %v2076
        %v2078 = vpop.f32.mrb[0].mxu0
        %2079 = vdwg.mxu0
        %2080 = vmatprep.subr.mxu0 0.0
        %v2081 = vand.u32 %v1971, 4294901760
        %v2082 = vsub.f32 %v1971, %v2081
        %v2083 = vand.u32 %v2082, 4294901760
        %v2084 = vsub.f32 %v2082, %v2083
        %v2085 = vand.u32 %v2084, 4294901760
        %2086 = vmatpush1.msra.mxu0 %v2085
        %2087 = vmatprep.subr.mxu0 0.0
        %v2088 = vand.u32 %v1972, 4294901760
        %v2089 = vsub.f32 %v1972, %v2088
        %v2090 = vand.u32 %v2089, 4294901760
        %v2091 = vsub.f32 %v2089, %v2090
        %v2092 = vand.u32 %v2091, 4294901760
        %2093 = vmatpush1.msra.mxu0 %v2092
        %2094 = vmatprep.subr.mxu0 0.0
        %2095 = vmatpush1.msra.mxu0 0.0
        %2096 = vmatprep.subr.mxu0 0.0
        %2097 = vmatpush1.msra.mxu0 0.0
        %2098 = vmatprep.subr.mxu0 0.0
        %2099 = vmatpush1.msra.mxu0 0.0
        %2100 = vmatprep.subr.mxu0 0.0
        %2101 = vmatpush1.msra.mxu0 0.0
        %2102 = vmatprep.subr.mxu0 0.0
        %2103 = vmatpush1.msra.mxu0 0.0
        %2104 = vmatprep.subr.mxu0 0.0
        %2105 = vmatpush1.msra.mxu0 0.0
        %2106 = vmatprep.subr.mxu0 0.0
        %2107 = vmatpush1.msra.mxu0 0.0
        %2108 = vmatprep.subr.mxu0 0.0
        %2109 = vmatpush1.msra.mxu0 0.0
        %2110 = vmatprep.subr.mxu0 0.0
        %2111 = vmatpush1.msra.mxu0 0.0
        %2112 = vmatprep.subr.mxu0 0.0
        %2113 = vmatpush1.msra.mxu0 0.0
        %2114 = vmatprep.subr.mxu0 0.0
        %2115 = vmatpush1.msra.mxu0 0.0
        %2116 = vmatprep.subr.mxu0 0.0
        %2117 = vmatpush1.msra.mxu0 0.0
        %2118 = vmatprep.subr.mxu0 0.0
        %2119 = vmatpush1.msra.mxu0 0.0
        %2120 = vmatprep.subr.mxu0 0.0
        %2121 = vmatpush1.msra.mxu0 0.0
        %2122 = vmatprep.subr.mxu0 0.0
        %2123 = vmatpush1.msra.mxu0 0.0
        %2124 = vmatprep.subr.mxu0 0.0
        %2125 = vmatpush1.msra.mxu0 0.0
        %2126 = vmatprep.subr.mxu0 0.0
        %2127 = vmatpush1.msra.mxu0 0.0
        %2128 = vmatprep.subr.mxu0 0.0
        %2129 = vmatpush1.msra.mxu0 0.0
        %2130 = vmatprep.subr.mxu0 0.0
        %2131 = vmatpush1.msra.mxu0 0.0
        %2132 = vmatprep.subr.mxu0 0.0
        %2133 = vmatpush1.msra.mxu0 0.0
        %2134 = vmatprep.subr.mxu0 0.0
        %2135 = vmatpush1.msra.mxu0 0.0
        %2136 = vmatprep.subr.mxu0 0.0
        %2137 = vmatpush1.msra.mxu0 0.0
        %2138 = vmatprep.subr.mxu0 0.0
        %2139 = vmatpush1.msra.mxu0 0.0
        %2140 = vmatprep.subr.mxu0 0.0
        %2141 = vmatpush1.msra.mxu0 0.0
        %2142 = vmatprep.subr.mxu0 0.0
        %2143 = vmatpush1.msra.mxu0 0.0
        %2144 = vmatprep.subr.mxu0 0.0
        %2145 = vmatpush1.msra.mxu0 0.0
        %2146 = vmatprep.subr.mxu0 0.0
        %2147 = vmatpush1.msra.mxu0 0.0
        %2148 = vmatprep.subr.mxu0 0.0
        %2149 = vmatpush1.msra.mxu0 0.0
        %2150 = vmatprep.subr.mxu0 0.0
        %2151 = vmatpush1.msra.mxu0 0.0
        %2152 = vmatprep.subr.mxu0 0.0
        %2153 = vmatpush1.msra.mxu0 0.0
        %2154 = vmatprep.mubr.f32.mxu0 0.0
        %v2155 = vand.u32 %v1367, 4294901760
        %2156 = vmatmul.mubr.f32.gmra.mrb[0].mxu0 %v2155
        %v2157 = vpop.f32.mrb[0].mxu0
        %v2158 = vadd.f32 %v2047, %v2157
        %v2159 = vpop.f32.mrb[0].mxu0
        %2160 = vmatprep.mubr.f32.mxu0 0.0
        %v2161 = vand.u32 %v1370, 4294901760
        %2162 = vmatmul.mubr.f32.gmra.mrb[0].mxu0 %v2161
        %v2163 = vpop.f32.mrb[0].mxu0
        %v2164 = vadd.f32 %v2057, %v2163
        %v2165 = vpop.f32.mrb[0].mxu0
        %2166 = vmatprep.mubr.f32.mxu0 0.0
        %v2167 = vand.u32 %v1373, 4294901760
        %2168 = vmatmul.mubr.f32.gmra.mrb[0].mxu0 %v2167
        %v2169 = vpop.f32.mrb[0].mxu0
        %v2170 = vadd.f32 %v2067, %v2169
        %v2171 = vpop.f32.mrb[0].mxu0
        %2172 = vmatprep.mubr.f32.mxu0 0.0
        %v2173 = vand.u32 %v1376, 4294901760
        %2174 = vmatmul.mubr.f32.gmra.mrb[0].mxu0 %v2173
        %v2175 = vpop.f32.mrb[0].mxu0
        %v2176 = vadd.f32 %v2077, %v2175
        %v2177 = vpop.f32.mrb[0].mxu0
        %2178 = vdwg.mxu0
        %2179 = vmatprep.subr.mxu0 0.0
        %v2180 = vand.u32 %v1971, 4294901760
        %v2181 = vsub.f32 %v1971, %v2180
        %2182 = vmatpush1.msra.mxu0 %v2181
        %2183 = vmatprep.subr.mxu0 0.0
        %v2184 = vand.u32 %v1972, 4294901760
        %v2185 = vsub.f32 %v1972, %v2184
        %2186 = vmatpush1.msra.mxu0 %v2185
        %2187 = vmatprep.subr.mxu0 0.0
        %2188 = vmatpush1.msra.mxu0 0.0
        %2189 = vmatprep.subr.mxu0 0.0
        %2190 = vmatpush1.msra.mxu0 0.0
        %2191 = vmatprep.subr.mxu0 0.0
        %2192 = vmatpush1.msra.mxu0 0.0
        %2193 = vmatprep.subr.mxu0 0.0
        %2194 = vmatpush1.msra.mxu0 0.0
        %2195 = vmatprep.subr.mxu0 0.0
        %2196 = vmatpush1.msra.mxu0 0.0
        %2197 = vmatprep.subr.mxu0 0.0
        %2198 = vmatpush1.msra.mxu0 0.0
        %2199 = vmatprep.subr.mxu0 0.0
        %2200 = vmatpush1.msra.mxu0 0.0
        %2201 = vmatprep.subr.mxu0 0.0
        %2202 = vmatpush1.msra.mxu0 0.0
        %2203 = vmatprep.subr.mxu0 0.0
        %2204 = vmatpush1.msra.mxu0 0.0
        %2205 = vmatprep.subr.mxu0 0.0
        %2206 = vmatpush1.msra.mxu0 0.0
        %2207 = vmatprep.subr.mxu0 0.0
        %2208 = vmatpush1.msra.mxu0 0.0
        %2209 = vmatprep.subr.mxu0 0.0
        %2210 = vmatpush1.msra.mxu0 0.0
        %2211 = vmatprep.subr.mxu0 0.0
        %2212 = vmatpush1.msra.mxu0 0.0
        %2213 = vmatprep.subr.mxu0 0.0
        %2214 = vmatpush1.msra.mxu0 0.0
        %2215 = vmatprep.subr.mxu0 0.0
        %2216 = vmatpush1.msra.mxu0 0.0
        %2217 = vmatprep.subr.mxu0 0.0
        %2218 = vmatpush1.msra.mxu0 0.0
        %2219 = vmatprep.subr.mxu0 0.0
        %2220 = vmatpush1.msra.mxu0 0.0
        %2221 = vmatprep.subr.mxu0 0.0
        %2222 = vmatpush1.msra.mxu0 0.0
        %2223 = vmatprep.subr.mxu0 0.0
        %2224 = vmatpush1.msra.mxu0 0.0
        %2225 = vmatprep.subr.mxu0 0.0
        %2226 = vmatpush1.msra.mxu0 0.0
        %2227 = vmatprep.subr.mxu0 0.0
        %2228 = vmatpush1.msra.mxu0 0.0
        %2229 = vmatprep.subr.mxu0 0.0
        %2230 = vmatpush1.msra.mxu0 0.0
        %2231 = vmatprep.subr.mxu0 0.0
        %2232 = vmatpush1.msra.mxu0 0.0
        %2233 = vmatprep.subr.mxu0 0.0
        %2234 = vmatpush1.msra.mxu0 0.0
        %2235 = vmatprep.subr.mxu0 0.0
        %2236 = vmatpush1.msra.mxu0 0.0
        %2237 = vmatprep.subr.mxu0 0.0
        %2238 = vmatpush1.msra.mxu0 0.0
        %2239 = vmatprep.subr.mxu0 0.0
        %2240 = vmatpush1.msra.mxu0 0.0
        %2241 = vmatprep.subr.mxu0 0.0
        %2242 = vmatpush1.msra.mxu0 0.0
        %2243 = vmatprep.subr.mxu0 0.0
        %2244 = vmatpush1.msra.mxu0 0.0
        %2245 = vmatprep.subr.mxu0 0.0
        %2246 = vmatpush1.msra.mxu0 0.0
        %2247 = vmatprep.mubr.f32.mxu0 0.0
        %v2248 = vand.u32 %v1367, 4294901760
        %v2249 = vsub.f32 %v1367, %v2248
        %2250 = vmatmul.mubr.f32.gmra.mrb[0].mxu0 %v2249
        %v2251 = vpop.f32.mrb[0].mxu0
        %v2252 = vadd.f32 %v2158, %v2251
        %v2253 = vpop.f32.mrb[0].mxu0
        %2254 = vmatprep.mubr.f32.mxu0 0.0
        %v2255 = vand.u32 %v1370, 4294901760
        %v2256 = vsub.f32 %v1370, %v2255
        %2257 = vmatmul.mubr.f32.gmra.mrb[0].mxu0 %v2256
        %v2258 = vpop.f32.mrb[0].mxu0
        %v2259 = vadd.f32 %v2164, %v2258
        %v2260 = vpop.f32.mrb[0].mxu0
        %2261 = vmatprep.mubr.f32.mxu0 0.0
        %v2262 = vand.u32 %v1373, 4294901760
        %v2263 = vsub.f32 %v1373, %v2262
        %2264 = vmatmul.mubr.f32.gmra.mrb[0].mxu0 %v2263
        %v2265 = vpop.f32.mrb[0].mxu0
        %v2266 = vadd.f32 %v2170, %v2265
        %v2267 = vpop.f32.mrb[0].mxu0
        %2268 = vmatprep.mubr.f32.mxu0 0.0
        %v2269 = vand.u32 %v1376, 4294901760
        %v2270 = vsub.f32 %v1376, %v2269
        %2271 = vmatmul.mubr.f32.gmra.mrb[0].mxu0 %v2270
        %v2272 = vpop.f32.mrb[0].mxu0
        %v2273 = vadd.f32 %v2176, %v2272
        %v2274 = vpop.f32.mrb[0].mxu0
        %2275 = vdwg.mxu0
        %2276 = vmatprep.subr.mxu0 0.0
        %v2277 = vand.u32 %v1971, 4294901760
        %2278 = vmatpush1.msra.mxu0 %v2277
        %2279 = vmatprep.subr.mxu0 0.0
        %v2280 = vand.u32 %v1972, 4294901760
        %2281 = vmatpush1.msra.mxu0 %v2280
        %2282 = vmatprep.subr.mxu0 0.0
        %2283 = vmatpush1.msra.mxu0 0.0
        %2284 = vmatprep.subr.mxu0 0.0
        %2285 = vmatpush1.msra.mxu0 0.0
        %2286 = vmatprep.subr.mxu0 0.0
        %2287 = vmatpush1.msra.mxu0 0.0
        %2288 = vmatprep.subr.mxu0 0.0
        %2289 = vmatpush1.msra.mxu0 0.0
        %2290 = vmatprep.subr.mxu0 0.0
        %2291 = vmatpush1.msra.mxu0 0.0
        %2292 = vmatprep.subr.mxu0 0.0
        %2293 = vmatpush1.msra.mxu0 0.0
        %2294 = vmatprep.subr.mxu0 0.0
        %2295 = vmatpush1.msra.mxu0 0.0
        %2296 = vmatprep.subr.mxu0 0.0
        %2297 = vmatpush1.msra.mxu0 0.0
        %2298 = vmatprep.subr.mxu0 0.0
        %2299 = vmatpush1.msra.mxu0 0.0
        %2300 = vmatprep.subr.mxu0 0.0
        %2301 = vmatpush1.msra.mxu0 0.0
        %2302 = vmatprep.subr.mxu0 0.0
        %2303 = vmatpush1.msra.mxu0 0.0
        %2304 = vmatprep.subr.mxu0 0.0
        %2305 = vmatpush1.msra.mxu0 0.0
        %2306 = vmatprep.subr.mxu0 0.0
        %2307 = vmatpush1.msra.mxu0 0.0
        %2308 = vmatprep.subr.mxu0 0.0
        %2309 = vmatpush1.msra.mxu0 0.0
        %2310 = vmatprep.subr.mxu0 0.0
        %2311 = vmatpush1.msra.mxu0 0.0
        %2312 = vmatprep.subr.mxu0 0.0
        %2313 = vmatpush1.msra.mxu0 0.0
        %2314 = vmatprep.subr.mxu0 0.0
        %2315 = vmatpush1.msra.mxu0 0.0
        %2316 = vmatprep.subr.mxu0 0.0
        %2317 = vmatpush1.msra.mxu0 0.0
        %2318 = vmatprep.subr.mxu0 0.0
        %2319 = vmatpush1.msra.mxu0 0.0
        %2320 = vmatprep.subr.mxu0 0.0
        %2321 = vmatpush1.msra.mxu0 0.0
        %2322 = vmatprep.subr.mxu0 0.0
        %2323 = vmatpush1.msra.mxu0 0.0
        %2324 = vmatprep.subr.mxu0 0.0
        %2325 = vmatpush1.msra.mxu0 0.0
        %2326 = vmatprep.subr.mxu0 0.0
        %2327 = vmatpush1.msra.mxu0 0.0
        %2328 = vmatprep.subr.mxu0 0.0
        %2329 = vmatpush1.msra.mxu0 0.0
        %2330 = vmatprep.subr.mxu0 0.0
        %2331 = vmatpush1.msra.mxu0 0.0
        %2332 = vmatprep.subr.mxu0 0.0
        %2333 = vmatpush1.msra.mxu0 0.0
        %2334 = vmatprep.subr.mxu0 0.0
        %2335 = vmatpush1.msra.mxu0 0.0
        %2336 = vmatprep.subr.mxu0 0.0
        %2337 = vmatpush1.msra.mxu0 0.0
        %2338 = vmatprep.subr.mxu0 0.0
        %2339 = vmatpush1.msra.mxu0 0.0
        %2340 = vmatprep.subr.mxu0 0.0
        %2341 = vmatpush1.msra.mxu0 0.0
        %2342 = vmatprep.mubr.f32.mxu0 0.0
        %v2343 = vand.u32 %v1367, 4294901760
        %v2344 = vsub.f32 %v1367, %v2343
        %v2345 = vand.u32 %v2344, 4294901760
        %2346 = vmatmul.mubr.f32.gmra.mrb[0].mxu0 %v2345
        %v2347 = vpop.f32.mrb[0].mxu0
        %v2348 = vadd.f32 %v2252, %v2347
        %v2349 = vpop.f32.mrb[0].mxu0
        %2350 = vmatprep.mubr.f32.mxu0 0.0
        %v2351 = vand.u32 %v1370, 4294901760
        %v2352 = vsub.f32 %v1370, %v2351
        %v2353 = vand.u32 %v2352, 4294901760
        %2354 = vmatmul.mubr.f32.gmra.mrb[0].mxu0 %v2353
        %v2355 = vpop.f32.mrb[0].mxu0
        %v2356 = vadd.f32 %v2259, %v2355
        %v2357 = vpop.f32.mrb[0].mxu0
        %2358 = vmatprep.mubr.f32.mxu0 0.0
        %v2359 = vand.u32 %v1373, 4294901760
        %v2360 = vsub.f32 %v1373, %v2359
        %v2361 = vand.u32 %v2360, 4294901760
        %2362 = vmatmul.mubr.f32.gmra.mrb[0].mxu0 %v2361
        %v2363 = vpop.f32.mrb[0].mxu0
        %v2364 = vadd.f32 %v2266, %v2363
        %v2365 = vpop.f32.mrb[0].mxu0
        %2366 = vmatprep.mubr.f32.mxu0 0.0
        %v2367 = vand.u32 %v1376, 4294901760
        %v2368 = vsub.f32 %v1376, %v2367
        %v2369 = vand.u32 %v2368, 4294901760
        %2370 = vmatmul.mubr.f32.gmra.mrb[0].mxu0 %v2369
        %v2371 = vpop.f32.mrb[0].mxu0
        %v2372 = vadd.f32 %v2273, %v2371
        %v2373 = vpop.f32.mrb[0].mxu0
        %2374 = vdwg.mxu0
        %2375 = vmatprep.subr.mxu0 0.0
        %v2376 = vand.u32 %v1971, 4294901760
        %v2377 = vsub.f32 %v1971, %v2376
        %v2378 = vand.u32 %v2377, 4294901760
        %2379 = vmatpush1.msra.mxu0 %v2378
        %2380 = vmatprep.subr.mxu0 0.0
        %v2381 = vand.u32 %v1972, 4294901760
        %v2382 = vsub.f32 %v1972, %v2381
        %v2383 = vand.u32 %v2382, 4294901760
        %2384 = vmatpush1.msra.mxu0 %v2383
        %2385 = vmatprep.subr.mxu0 0.0
        %2386 = vmatpush1.msra.mxu0 0.0
        %2387 = vmatprep.subr.mxu0 0.0
        %2388 = vmatpush1.msra.mxu0 0.0
        %2389 = vmatprep.subr.mxu0 0.0
        %2390 = vmatpush1.msra.mxu0 0.0
        %2391 = vmatprep.subr.mxu0 0.0
        %2392 = vmatpush1.msra.mxu0 0.0
        %2393 = vmatprep.subr.mxu0 0.0
        %2394 = vmatpush1.msra.mxu0 0.0
        %2395 = vmatprep.subr.mxu0 0.0
        %2396 = vmatpush1.msra.mxu0 0.0
        %2397 = vmatprep.subr.mxu0 0.0
        %2398 = vmatpush1.msra.mxu0 0.0
        %2399 = vmatprep.subr.mxu0 0.0
        %2400 = vmatpush1.msra.mxu0 0.0
        %2401 = vmatprep.subr.mxu0 0.0
        %2402 = vmatpush1.msra.mxu0 0.0
        %2403 = vmatprep.subr.mxu0 0.0
        %2404 = vmatpush1.msra.mxu0 0.0
        %2405 = vmatprep.subr.mxu0 0.0
        %2406 = vmatpush1.msra.mxu0 0.0
        %2407 = vmatprep.subr.mxu0 0.0
        %2408 = vmatpush1.msra.mxu0 0.0
        %2409 = vmatprep.subr.mxu0 0.0
        %2410 = vmatpush1.msra.mxu0 0.0
        %2411 = vmatprep.subr.mxu0 0.0
        %2412 = vmatpush1.msra.mxu0 0.0
        %2413 = vmatprep.subr.mxu0 0.0
        %2414 = vmatpush1.msra.mxu0 0.0
        %2415 = vmatprep.subr.mxu0 0.0
        %2416 = vmatpush1.msra.mxu0 0.0
        %2417 = vmatprep.subr.mxu0 0.0
        %2418 = vmatpush1.msra.mxu0 0.0
        %2419 = vmatprep.subr.mxu0 0.0
        %2420 = vmatpush1.msra.mxu0 0.0
        %2421 = vmatprep.subr.mxu0 0.0
        %2422 = vmatpush1.msra.mxu0 0.0
        %2423 = vmatprep.subr.mxu0 0.0
        %2424 = vmatpush1.msra.mxu0 0.0
        %2425 = vmatprep.subr.mxu0 0.0
        %2426 = vmatpush1.msra.mxu0 0.0
        %2427 = vmatprep.subr.mxu0 0.0
        %2428 = vmatpush1.msra.mxu0 0.0
        %2429 = vmatprep.subr.mxu0 0.0
        %2430 = vmatpush1.msra.mxu0 0.0
        %2431 = vmatprep.subr.mxu0 0.0
        %2432 = vmatpush1.msra.mxu0 0.0
        %2433 = vmatprep.subr.mxu0 0.0
        %2434 = vmatpush1.msra.mxu0 0.0
        %2435 = vmatprep.subr.mxu0 0.0
        %2436 = vmatpush1.msra.mxu0 0.0
        %2437 = vmatprep.subr.mxu0 0.0
        %2438 = vmatpush1.msra.mxu0 0.0
        %2439 = vmatprep.subr.mxu0 0.0
        %2440 = vmatpush1.msra.mxu0 0.0
        %2441 = vmatprep.subr.mxu0 0.0
        %2442 = vmatpush1.msra.mxu0 0.0
        %2443 = vmatprep.subr.mxu0 0.0
        %2444 = vmatpush1.msra.mxu0 0.0
        %2445 = vmatprep.mubr.f32.mxu0 0.0
        %v2446 = vand.u32 %v1367, 4294901760
        %2447 = vmatmul.mubr.f32.gmra.mrb[0].mxu0 %v2446
        %v2448 = vpop.f32.mrb[0].mxu0
        %v2449 = vadd.f32 %v2348, %v2448
        %v2450 = vpop.f32.mrb[0].mxu0
        %2451 = vmatprep.mubr.f32.mxu0 0.0
        %v2452 = vand.u32 %v1370, 4294901760
        %2453 = vmatmul.mubr.f32.gmra.mrb[0].mxu0 %v2452
        %v2454 = vpop.f32.mrb[0].mxu0
        %v2455 = vadd.f32 %v2356, %v2454
        %v2456 = vpop.f32.mrb[0].mxu0
        %2457 = vmatprep.mubr.f32.mxu0 0.0
        %v2458 = vand.u32 %v1373, 4294901760
        %2459 = vmatmul.mubr.f32.gmra.mrb[0].mxu0 %v2458
        %v2460 = vpop.f32.mrb[0].mxu0
        %v2461 = vadd.f32 %v2364, %v2460
        %v2462 = vpop.f32.mrb[0].mxu0
        %2463 = vmatprep.mubr.f32.mxu0 0.0
        %v2464 = vand.u32 %v1376, 4294901760
        %2465 = vmatmul.mubr.f32.gmra.mrb[0].mxu0 %v2464
        %v2466 = vpop.f32.mrb[0].mxu0
        %v2467 = vadd.f32 %v2372, %v2466
        %v2468 = vpop.f32.mrb[0].mxu0
        %2469 = vdwg.mxu0
        %2470 = vmatprep.subr.mxu0 0.0
        %v2471 = vand.u32 %v1971, 4294901760
        %2472 = vmatpush1.msra.mxu0 %v2471
        %2473 = vmatprep.subr.mxu0 0.0
        %v2474 = vand.u32 %v1972, 4294901760
        %2475 = vmatpush1.msra.mxu0 %v2474
        %2476 = vmatprep.subr.mxu0 0.0
        %2477 = vmatpush1.msra.mxu0 0.0
        %2478 = vmatprep.subr.mxu0 0.0
        %2479 = vmatpush1.msra.mxu0 0.0
        %2480 = vmatprep.subr.mxu0 0.0
        %2481 = vmatpush1.msra.mxu0 0.0
        %2482 = vmatprep.subr.mxu0 0.0
        %2483 = vmatpush1.msra.mxu0 0.0
        %2484 = vmatprep.subr.mxu0 0.0
        %2485 = vmatpush1.msra.mxu0 0.0
        %2486 = vmatprep.subr.mxu0 0.0
        %2487 = vmatpush1.msra.mxu0 0.0
        %2488 = vmatprep.subr.mxu0 0.0
        %2489 = vmatpush1.msra.mxu0 0.0
        %2490 = vmatprep.subr.mxu0 0.0
        %2491 = vmatpush1.msra.mxu0 0.0
        %2492 = vmatprep.subr.mxu0 0.0
        %2493 = vmatpush1.msra.mxu0 0.0
        %2494 = vmatprep.subr.mxu0 0.0
        %2495 = vmatpush1.msra.mxu0 0.0
        %2496 = vmatprep.subr.mxu0 0.0
        %2497 = vmatpush1.msra.mxu0 0.0
        %2498 = vmatprep.subr.mxu0 0.0
        %2499 = vmatpush1.msra.mxu0 0.0
        %2500 = vmatprep.subr.mxu0 0.0
        %2501 = vmatpush1.msra.mxu0 0.0
        %2502 = vmatprep.subr.mxu0 0.0
        %2503 = vmatpush1.msra.mxu0 0.0
        %2504 = vmatprep.subr.mxu0 0.0
        %2505 = vmatpush1.msra.mxu0 0.0
        %2506 = vmatprep.subr.mxu0 0.0
        %2507 = vmatpush1.msra.mxu0 0.0
        %2508 = vmatprep.subr.mxu0 0.0
        %2509 = vmatpush1.msra.mxu0 0.0
        %2510 = vmatprep.subr.mxu0 0.0
        %2511 = vmatpush1.msra.mxu0 0.0
        %2512 = vmatprep.subr.mxu0 0.0
        %2513 = vmatpush1.msra.mxu0 0.0
        %2514 = vmatprep.subr.mxu0 0.0
        %2515 = vmatpush1.msra.mxu0 0.0
        %2516 = vmatprep.subr.mxu0 0.0
        %2517 = vmatpush1.msra.mxu0 0.0
        %2518 = vmatprep.subr.mxu0 0.0
        %2519 = vmatpush1.msra.mxu0 0.0
        %2520 = vmatprep.subr.mxu0 0.0
        %2521 = vmatpush1.msra.mxu0 0.0
        %2522 = vmatprep.subr.mxu0 0.0
        %2523 = vmatpush1.msra.mxu0 0.0
        %2524 = vmatprep.subr.mxu0 0.0
        %2525 = vmatpush1.msra.mxu0 0.0
        %2526 = vmatprep.subr.mxu0 0.0
        %2527 = vmatpush1.msra.mxu0 0.0
        %2528 = vmatprep.subr.mxu0 0.0
        %2529 = vmatpush1.msra.mxu0 0.0
        %2530 = vmatprep.subr.mxu0 0.0
        %2531 = vmatpush1.msra.mxu0 0.0
        %2532 = vmatprep.subr.mxu0 0.0
        %2533 = vmatpush1.msra.mxu0 0.0
        %2534 = vmatprep.subr.mxu0 0.0
        %2535 = vmatpush1.msra.mxu0 0.0
        %2536 = vmatprep.mubr.f32.mxu0 0.0
        %v2537 = vand.u32 %v1367, 4294901760
        %2538 = vmatmul.mubr.f32.gmra.mrb[0].mxu0 %v2537
        %v2539 = vpop.f32.mrb[0].mxu0
        %v2540 = vadd.f32 %v2449, %v2539
        %v2541 = vpop.f32.mrb[0].mxu0
        %2542 = vmatprep.mubr.f32.mxu0 0.0
        %v2543 = vand.u32 %v1370, 4294901760
        %2544 = vmatmul.mubr.f32.gmra.mrb[0].mxu0 %v2543
        %v2545 = vpop.f32.mrb[0].mxu0
        %v2546 = vadd.f32 %v2455, %v2545
        %v2547 = vpop.f32.mrb[0].mxu0
        %2548 = vmatprep.mubr.f32.mxu0 0.0
        %v2549 = vand.u32 %v1373, 4294901760
        %2550 = vmatmul.mubr.f32.gmra.mrb[0].mxu0 %v2549
        %v2551 = vpop.f32.mrb[0].mxu0
        %v2552 = vadd.f32 %v2461, %v2551
        %v2553 = vpop.f32.mrb[0].mxu0
        %2554 = vmatprep.mubr.f32.mxu0 0.0
        %v2555 = vand.u32 %v1376, 4294901760
        %2556 = vmatmul.mubr.f32.gmra.mrb[0].mxu0 %v2555
        %v2557 = vpop.f32.mrb[0].mxu0
        %v2558 = vadd.f32 %v2467, %v2557
        %v2559 = vpop.f32.mrb[0].mxu0
        %2560 = vdwg.mxu0
        %s2561 = scalar_lea.vmem %s137, 24 [#allocation2]
        %2562 = vst.msk [vmem:[%s2561] sm:$0xff] %vm755, %v2540
        %2563 = vst.msk [vmem:[%s2561 + $0x20] sm:$0xff] %vm755, %v2546
        %2564 = vst.msk [vmem:[%s2561 + $0x40] sm:$0xff] %vm755, %v2552
        %2565 = vst.msk [vmem:[%s2561 + $0x60] sm:$0xff] %vm755, %v2558
        %s2566 = sand.u32 %s71, 1
        %s2567 = scalar_lea.sflag [#allocation3], %s2566
        %s2568 = sand.u32 %s71, 1
        %s2569 = smul.addr %s2568, 128
        %s2570 = scalar_lea.vmem [#allocation2], %s2569
        // Predicated region
        $region29: #{tpu_custom_call.1} parent=27 // pred_check
          %p2571 = pneg %p81
        $region30: #{tpu_custom_call.1} parent=27 // pred_check_branch
          %2573 = sbr.rel (%p2571) target = $region32
        $region31: #{tpu_custom_call.1} parent=27 // pred_region
          %s2574 = smul.u32 4, %s16
          %s2576 = ssub.s32 2048, 2048
          %2577 = vsyncadd %s2567, %s2576
          %s2578 = smul.addr %s2574, 4
          %s2579 = smul.addr %s2578, 128
          %s2580 = scalar_lea.hbm %s2, %s2579
          %s2581 = sshll.u32 %s2570, 4
          %s2582 = int_to_ptr.vmem [resolvable:$true] %s2581
          %2587 = dma.vmem_to_hbm [thread:$0]  %s2582, 2048, %s2580, %s2567, 128, 128, 8
        $region32: #{tpu_custom_call.1} parent=27 // pred_fallthru
          _
      $region28: #{tpu_custom_call.1} parent=5 // pred_fallthru
        _
      %p2588 = scmp.le.s32.totalorder 2, %s11
      // Predicated region
      $region33: #{tpu_custom_call.1} parent=5 // pred_check
        %p2589 = pneg %p2588
      $region34: #{tpu_custom_call.1} parent=5 // pred_check_branch
        %2591 = sbr.rel (%p2589) target = $region36
      $region35: #{tpu_custom_call.1} parent=5 // pred_region
        %s2592 = ssub.s32 %s11, 2
        // Predicated region
        $region37: #{tpu_custom_call.1} parent=35 // pred_check
          %p2593 = pneg %p87
        $region38: #{tpu_custom_call.1} parent=35 // pred_check_branch
          %2595 = sbr.rel (%p2593) target = $region40
        $region39: #{tpu_custom_call.1} parent=35 // pred_region
          %s2596 = sand.u32 %s72, 1
          %s2597 = scalar_lea.sflag [#allocation3], %s2596
          %s2598 = sand.u32 %s72, 1
          %s2599 = smul.addr %s2598, 128
          %s2600 = scalar_lea.vmem [#allocation2], %s2599
          %2601 = dma.done %s2597, 2048
        $region40: #{tpu_custom_call.1} parent=35 // pred_fallthru
          _
      $region36: #{tpu_custom_call.1} parent=5 // pred_fallthru
        _
    $region6: #{tpu_custom_call.1} parent=1 // loop_footer
      %s15 = sadd.s32 1, %s11
    $region7: #{tpu_custom_call.1} parent=1 // loop_footer_branch
      %10 = sbr.rel target = $region3
    $region8: #{tpu_custom_call.1} parent=1 // loop_exit
      _
    %2602 = vsyncpa [#allocation3], 1
    %s2603 = scalar_lea.sflag [#allocation3], 1
    %2604 = vsyncpa %s2603, 1

</llo_original>
